<compile_context>
chip_gen: v7x
topology: tpu7x:2x2x1
jax: 0.10.0
libtpu: 0.0.40
codegen_flags: <defaults>
</compile_context>

<pallas_src>
import functools

import jax
import jax.numpy as jnp
from jax.experimental import pallas as pl
from jax.experimental.pallas import tpu as pltpu

LN_EPS = 1e-5


# ----------------------------------------------------------------------------
# helpers
# ----------------------------------------------------------------------------
def _nbytes(a):
    return int(a.size * a.dtype.itemsize)


def _vmem_limit_bytes(*per_buffer_bytes):
    # Inputs/outputs are double-buffered by the BlockSpec pipeline; add fixed
    # headroom for f32 intermediates / vreg spills.  Explicit limit instead of
    # the 16/32 MiB scoped default (review item).
    return int(2 * sum(int(b) for b in per_buffer_bytes)) + (8 << 20)


def _choose_tile_rows(n):
    # MXU-aligned row tiles at real sizes (multiples of 256 keep the v6e/v7x
    # 256x256 systolic array full; 512 rows x 3072 f32 intermediate ~ 6 MB).
    # Shrink at toy sizes so the row grid still has >= 2 programs, which lets
    # dimension_semantics="parallel" shard across v7x's two TensorCores.
    for t in (512, 256, 128, 64, 32, 16, 8):
        if n >= 2 * t:
            return t
    return 8


def _pad_rows(x2, tile_rows):
    n = x2.shape[0]
    n_pad = pl.cdiv(n, tile_rows) * tile_rows
    if n_pad != n:
        x2 = jnp.pad(x2, ((0, n_pad - n), (0, 0)))
    return x2, n


def _layernorm(x, gamma, beta):
    mu = jnp.mean(x, axis=-1, keepdims=True)
    var = jnp.mean(jnp.square(x - mu), axis=-1, keepdims=True)
    return (x - mu) * jax.lax.rsqrt(var + LN_EPS) * gamma + beta


# ----------------------------------------------------------------------------
# kernel 1: fused LN -> multi-head attention -> out-proj -> residual add
# ----------------------------------------------------------------------------
def _attn_block_kernel(x_ref, g_ref, b_ref, wqkv_ref, wo_ref, bo_ref, o_ref,
                       *, num_heads, scale):
    x = x_ref[0]                                            # (T, D) f32 residual stream
    t, d = x.shape
    hs = d // num_heads

    y = _layernorm(x, g_ref[...], b_ref[...]).astype(wqkv_ref.dtype)
    qkv = jnp.dot(y, wqkv_ref[...], preferred_element_type=jnp.float32)   # (T, 3D)
    q, k, v = qkv[:, :d], qkv[:, d:2 * d], qkv[:, 2 * d:]

    # concat(heads) @ Wo  ==  sum_h head_h @ Wo[h*hs:(h+1)*hs, :]
    acc = jnp.zeros((t, d), jnp.float32)
    for h in range(num_heads):
        sl = slice(h * hs, (h + 1) * hs)
        qh = q[:, sl].astype(jnp.bfloat16)
        kh = k[:, sl].astype(jnp.bfloat16)
        vh = v[:, sl].astype(jnp.bfloat16)
        s = jax.lax.dot_general(qh, kh, (((1,), (1,)), ((), ())),
                                preferred_element_type=jnp.float32) * scale
        s = s - jnp.max(s, axis=-1, keepdims=True)
        p = jnp.exp(s)
        p = p / jnp.sum(p, axis=-1, keepdims=True)
        head = jnp.dot(p.astype(jnp.bfloat16), vh,
                       preferred_element_type=jnp.float32)               # (T, hs)
        acc = acc + jnp.dot(head.astype(wo_ref.dtype), wo_ref[sl, :],
                            preferred_element_type=jnp.float32)
    out = acc + bo_ref[...]
    o_ref[0] = (x + out).astype(o_ref.dtype)                 # fused residual add


def attention_block(x, gamma, beta, wqkv, wo, bo, *, num_heads):
    B, T, D = x.shape
    scale = float(D) ** -0.5          # PyTorch uses C**-0.5 with C = EMBEDDING_SIZE
    kernel = functools.partial(_attn_block_kernel, num_heads=num_heads, scale=scale)
    weight_bytes = _nbytes(wqkv) + _nbytes(wo) + _nbytes(bo) + _nbytes(gamma) + _nbytes(beta)
    block_bytes = T * D * 4
    flops = 2 * B * T * D * 3 * D + 4 * B * T * T * D + 2 * B * T * D * D
    return pl.pallas_call(
        kernel,
        out_shape=jax.ShapeDtypeStruct((B, T, D), x.dtype),
        grid_spec=pltpu.PrefetchScalarGridSpec(
            num_scalar_prefetch=0,
            grid=(B,),
            in_specs=[
                pl.BlockSpec((1, T, D), lambda b: (b, 0, 0)),       # x (per batch)
                pl.BlockSpec((1, D), lambda b: (0, 0)),             # ln gamma
                pl.BlockSpec((1, D), lambda b: (0, 0)),             # ln beta
                pl.BlockSpec((D, 3 * D), lambda b: (0, 0)),         # fused QKV weights
                pl.BlockSpec((D, D), lambda b: (0, 0)),             # out-proj weights
                pl.BlockSpec((1, D), lambda b: (0, 0)),             # out-proj bias
            ],
            out_specs=pl.BlockSpec((1, T, D), lambda b: (b, 0, 0)),
        ),
        compiler_params=pltpu.CompilerParams(
            dimension_semantics=("parallel",),
            vmem_limit_bytes=_vmem_limit_bytes(
                2 * block_bytes, weight_bytes, T * 3 * D * 4, num_heads * T * T * 4)),
        cost_estimate=pl.CostEstimate(
            flops=int(flops),
            transcendentals=int(B * num_heads * T * T),
            bytes_accessed=int(2 * B * T * D * 4 + weight_bytes)),
    )(x, gamma, beta, wqkv, wo, bo)


# ----------------------------------------------------------------------------
# kernel 2: fused LN -> Linear -> ReLU -> Linear -> residual add  (FFN block)
# ----------------------------------------------------------------------------
def _ffn_block_kernel(x_ref, g_ref, b_ref, w1_ref, b1_ref, w2_ref, b2_ref, o_ref):
    x = x_ref[...]                                              # (tile_rows, D) f32
    y = _layernorm(x, g_ref[...], b_ref[...]).astype(w1_ref.dtype)
    h = jnp.dot(y, w1_ref[...], preferred_element_type=jnp.float32) + b1_ref[...]
    h = jnp.maximum(h, 0.0).astype(w2_ref.dtype)                # ReLU, bf16 for MXU
    out = jnp.dot(h, w2_ref[...], preferred_element_type=jnp.float32) + b2_ref[...]
    o_ref[...] = (x + out).astype(o_ref.dtype)                  # fused residual add


def ffn_block(x, gamma, beta, w1, b1, w2, b2, *, tile_rows=None):
    lead, d = x.shape[:-1], x.shape[-1]
    hidden = w1.shape[-1]
    x2 = x.reshape(-1, d)
    if tile_rows is None:
        tile_rows = _choose_tile_rows(x2.shape[0])
    x2, n = _pad_rows(x2, tile_rows)        # pad: every tile full, stores unmasked
    n_pad = x2.shape[0]
    weight_bytes = (_nbytes(w1) + _nbytes(w2) + _nbytes(b1) + _nbytes(b2)
                    + _nbytes(gamma) + _nbytes(beta))
    tile_bytes = tile_rows * d * 4
    out = pl.pallas_call(
        _ffn_block_kernel,
        out_shape=jax.ShapeDtypeStruct((n_pad, d), x.dtype),
        grid_spec=pltpu.PrefetchScalarGridSpec(
            num_scalar_prefetch=0,
            grid=(n_pad // tile_rows,),
            in_specs=[
                pl.BlockSpec((tile_rows, d), lambda i: (i, 0)),   # x tile
                pl.BlockSpec((1, d), lambda i: (0, 0)),           # ln gamma
                pl.BlockSpec((1, d), lambda i: (0, 0)),           # ln beta
                pl.BlockSpec((d, hidden), lambda i: (0, 0)),      # w1 (resident, bf16)
                pl.BlockSpec((1, hidden), lambda i: (0, 0)),      # b1
                pl.BlockSpec((hidden, d), lambda i: (0, 0)),      # w2 (resident, bf16)
                pl.BlockSpec((1, d), lambda i: (0, 0)),           # b2
            ],
            out_specs=pl.BlockSpec((tile_rows, d), lambda i: (i, 0)),
        ),
        compiler_params=pltpu.CompilerParams(
            dimension_semantics=("parallel",),
            vmem_limit_bytes=_vmem_limit_bytes(
                2 * tile_bytes, weight_bytes, tile_rows * hidden * 4)),
        cost_estimate=pl.CostEstimate(
            flops=int(4 * n_pad * d * hidden),
            transcendentals=int(n_pad),
            bytes_accessed=int(2 * n_pad * d * 4 + weight_bytes)),
    )(x2, gamma, beta, w1, b1, w2, b2)
    return out[:n].reshape(*lead, d)


# ----------------------------------------------------------------------------
# kernel 3: final LayerNorm + vocab projection
# ----------------------------------------------------------------------------
def _final_kernel(x_ref, g_ref, b_ref, wf_ref, bf_ref, o_ref):
    x = x_ref[...]
    y = _layernorm(x, g_ref[...], b_ref[...]).astype(wf_ref.dtype)
    logits = jnp.dot(y, wf_ref[...], preferred_element_type=jnp.float32) + bf_ref[...]
    o_ref[...] = logits.astype(o_ref.dtype)


def final_head(x, gamma, beta, wf, bias, *, tile_rows=None):
    lead, d = x.shape[:-1], x.shape[-1]
    vocab = wf.shape[-1]
    x2 = x.reshape(-1, d)
    if tile_rows is None:
        tile_rows = _choose_tile_rows(x2.shape[0])
    x2, n = _pad_rows(x2, tile_rows)
    n_pad = x2.shape[0]
    weight_bytes = _nbytes(wf) + _nbytes(bias) + _nbytes(gamma) + _nbytes(beta)
    out = pl.pallas_call(
        _final_kernel,
        out_shape=jax.ShapeDtypeStruct((n_pad, vocab), x.dtype),
        grid_spec=pltpu.PrefetchScalarGridSpec(
            num_scalar_prefetch=0,
            grid=(n_pad // tile_rows,),
            in_specs=[
                pl.BlockSpec((tile_rows, d), lambda i: (i, 0)),
                pl.BlockSpec((1, d), lambda i: (0, 0)),
                pl.BlockSpec((1, d), lambda i: (0, 0)),
                pl.BlockSpec((d, vocab), lambda i: (0, 0)),
                pl.BlockSpec((1, vocab), lambda i: (0, 0)),
            ],
            out_specs=pl.BlockSpec((tile_rows, vocab), lambda i: (i, 0)),
        ),
        compiler_params=pltpu.CompilerParams(
            dimension_semantics=("parallel",),
            vmem_limit_bytes=_vmem_limit_bytes(
                tile_rows * d * 4, tile_rows * vocab * 4, weight_bytes)),
        cost_estimate=pl.CostEstimate(
            flops=int(2 * n_pad * d * vocab),
            transcendentals=int(n_pad),
            bytes_accessed=int(n_pad * (d + vocab) * 4 + weight_bytes)),
    )(x2, gamma, beta, wf, bias)
    return out[:n].reshape(*lead, vocab)


# ----------------------------------------------------------------------------
# full BERT forward (inference path; target_info/loss not implemented)
# ----------------------------------------------------------------------------
def bert_forward(params, tokens, *, num_heads):
    # TODO(synk): embedding-table gathers stay in XLA (jnp.take); a Pallas DMA
    # gather kernel is possible but not worth it at these sizes.
    T = tokens.shape[1]
    x = jnp.take(params["tok_emb"], tokens, axis=0) + params["pos_emb"][:T]
    for blk in params["blocks"]:
        x = attention_block(x, blk["ln1_g"], blk["ln1_b"],
                            blk["wqkv"], blk["wo"], blk["bo"], num_heads=num_heads)
        x = ffn_block(x, blk["ln2_g"], blk["ln2_b"],
                      blk["w1"], blk["b1"], blk["w2"], blk["b2"])
    return final_head(x, params["lnf_g"], params["lnf_b"], params["wf"], params["bf"])


# pure-JAX reference with identical dtype handling (bf16 matmuls, f32 accum)
def bert_reference(params, tokens, *, num_heads):
    T = tokens.shape[1]
    x = jnp.take(params["tok_emb"], tokens, axis=0) + params["pos_emb"][:T]
    d = x.shape[-1]
    hs = d // num_heads
    scale = float(d) ** -0.5
    for blk in params["blocks"]:
        y = _layernorm(x, blk["ln1_g"], blk["ln1_b"]).astype(jnp.bfloat16)
        qkv = jnp.einsum("btd,df->btf", y, blk["wqkv"],
                         preferred_element_type=jnp.float32)
        q, k, v = qkv[..., :d], qkv[..., d:2 * d], qkv[..., 2 * d:]
        heads = []
        for h in range(num_heads):
            sl = slice(h * hs, (h + 1) * hs)
            qh, kh, vh = (t[..., sl].astype(jnp.bfloat16) for t in (q, k, v))
            s = jnp.einsum("btd,bsd->bts", qh, kh,
                           preferred_element_type=jnp.float32) * scale
            p = jax.nn.softmax(s, axis=-1)
            heads.append(jnp.einsum("bts,bsd->btd", p.astype(jnp.bfloat16), vh,
                                    preferred_element_type=jnp.float32))
        att = jnp.concatenate(heads, axis=-1).astype(jnp.bfloat16)
        x = x + jnp.einsum("btd,df->btf", att, blk["wo"],
                           preferred_element_type=jnp.float32) + blk["bo"]
        y = _layernorm(x, blk["ln2_g"], blk["ln2_b"]).astype(jnp.bfloat16)
        h1 = jnp.einsum("btd,df->btf", y, blk["w1"],
                        preferred_element_type=jnp.float32) + blk["b1"]
        h1 = jnp.maximum(h1, 0.0).astype(jnp.bfloat16)
        x = x + jnp.einsum("btf,fd->btd", h1, blk["w2"],
                           preferred_element_type=jnp.float32) + blk["b2"]
    y = _layernorm(x, params["lnf_g"], params["lnf_b"]).astype(jnp.bfloat16)
    return jnp.einsum("btd,dv->btv", y, params["wf"],
                      preferred_element_type=jnp.float32) + params["bf"]


# ----------------------------------------------------------------------------
# parameter init (deterministic; weights stored pre-transposed, matmul weights bf16)
# ----------------------------------------------------------------------------
def init_params(key, *, vocab_size, max_context, emb, num_blocks,
                w_dtype=jnp.bfloat16):
    hidden = 4 * emb

    def uniform(k, shape, fan_in):
        lim = 1.0 / (fan_in ** 0.5)
        return jax.random.uniform(k, shape, jnp.float32, -lim, lim)

    k_tok, k_pos, kw_f, kb_f, kg_f, kbeta_f, key = jax.random.split(key, 7)
    params = {
        "tok_emb": jax.random.normal(k_tok, (vocab_size, emb), jnp.float32),
        "pos_emb": jax.random.normal(k_pos, (max_context, emb), jnp.float32),
        "blocks": [],
        "lnf_g": 1.0 + 0.1 * jax.random.normal(kg_f, (1, emb), jnp.float32),
        "lnf_b": 0.1 * jax.random.normal(kbeta_f, (1, emb), jnp.float32),
        "wf": uniform(kw_f, (emb, vocab_size), emb).astype(w_dtype),
        "bf": uniform(kb_f, (1, vocab_size), emb),
    }
    for _ in range(num_blocks):
        (key, kqkv, kwo, kbo, kw1, kb1, kw2, kb2,
         kg1, kbeta1, kg2, kbeta2) = jax.random.split(key, 12)
        params["blocks"].append({
            "ln1_g": 1.0 + 0.1 * jax.random.normal(kg1, (1, emb), jnp.float32),
            "ln1_b": 0.1 * jax.random.normal(kbeta1, (1, emb), jnp.float32),
            "wqkv": uniform(kqkv, (emb, 3 * emb), emb).astype(w_dtype),
            "wo": uniform(kwo, (emb, emb), emb).astype(w_dtype),
            "bo": uniform(kbo, (1, emb), emb),
            "ln2_g": 1.0 + 0.1 * jax.random.normal(kg2, (1, emb), jnp.float32),
            "ln2_b": 0.1 * jax.random.normal(kbeta2, (1, emb), jnp.float32),
            "w1": uniform(kw1, (emb, hidden), emb).astype(w_dtype),
            "b1": uniform(kb1, (1, hidden), emb),
            "w2": uniform(kw2, (hidden, emb), hidden).astype(w_dtype),
            "b2": uniform(kb2, (1, emb), hidden),
        })
    return params


if __name__ == "__main__":
    # Scaled-down BERTModel config (module uses 768/4 heads/4 blocks at full size).
    vocab_size = 64
    max_context = 16
    emb = 32
    num_heads = 4
    num_blocks = 2
    batch, seq = 2, 8

    key = jax.random.PRNGKey(0)
    kp, kt = jax.random.split(key)
    params = init_params(kp, vocab_size=vocab_size, max_context=max_context,
                         emb=emb, num_blocks=num_blocks)
    tokens = jax.random.randint(kt, (batch, seq), 0, vocab_size)

    fwd = jax.jit(functools.partial(bert_forward, num_heads=num_heads))
    logits = jax.block_until_ready(fwd(params, tokens))

    ref = bert_reference(params, tokens, num_heads=num_heads)
    assert logits.shape == (batch, seq, vocab_size)
    assert bool(jnp.isfinite(logits).all())
    max_err = float(jnp.max(jnp.abs(logits - ref)))
    assert jnp.allclose(logits, ref, atol=2e-2, rtol=2e-2), max_err

    print("KERNEL_OK")
</pallas_src>

<mosaic_0001>
module attributes {stable_mosaic.version = 11 : i64} {
  func.func @_ffn_block_kernel(%arg0: i32, %arg1: memref<8x32xf32, #tpu.memory_space<vmem>>, %arg2: memref<1x32xf32, #tpu.memory_space<vmem>>, %arg3: memref<1x32xf32, #tpu.memory_space<vmem>>, %arg4: memref<32x128xbf16, #tpu.memory_space<vmem>>, %arg5: memref<1x128xf32, #tpu.memory_space<vmem>>, %arg6: memref<128x32xbf16, #tpu.memory_space<vmem>>, %arg7: memref<1x32xf32, #tpu.memory_space<vmem>>, %arg8: memref<8x32xf32, #tpu.memory_space<vmem>>) attributes {dimension_semantics = [#tpu.dimension_semantics<parallel>], iteration_bounds = array<i64: 2>, scalar_prefetch = 0 : i64, scratch_operands = 0 : i64, tpu.core_type = #tpu.core_type<tc>, window_params = [{transform_indices = @transform_0, window_bounds = array<i64: 8, 32>}, {pipeline_mode = #tpu.pipeline_mode<synchronous>, transform_indices = @transform_1, window_bounds = array<i64: 1, 32>}, {pipeline_mode = #tpu.pipeline_mode<synchronous>, transform_indices = @transform_2, window_bounds = array<i64: 1, 32>}, {pipeline_mode = #tpu.pipeline_mode<synchronous>, transform_indices = @transform_3, window_bounds = array<i64: 32, 128>}, {pipeline_mode = #tpu.pipeline_mode<synchronous>, transform_indices = @transform_4, window_bounds = array<i64: 1, 128>}, {pipeline_mode = #tpu.pipeline_mode<synchronous>, transform_indices = @transform_5, window_bounds = array<i64: 128, 32>}, {pipeline_mode = #tpu.pipeline_mode<synchronous>, transform_indices = @transform_6, window_bounds = array<i64: 1, 32>}, {transform_indices = @transform_7, window_bounds = array<i64: 8, 32>}]} {
    %c0 = arith.constant 0 : index
    %c0_0 = arith.constant 0 : index
    %0 = vector.load %arg1[%c0, %c0_0] : memref<8x32xf32, #tpu.memory_space<vmem>>, vector<8x32xf32>
    %c0_1 = arith.constant 0 : index
    %c0_2 = arith.constant 0 : index
    %1 = vector.load %arg2[%c0_1, %c0_2] : memref<1x32xf32, #tpu.memory_space<vmem>>, vector<1x32xf32>
    %c0_3 = arith.constant 0 : index
    %c0_4 = arith.constant 0 : index
    %2 = vector.load %arg3[%c0_3, %c0_4] : memref<1x32xf32, #tpu.memory_space<vmem>>, vector<1x32xf32>
    %cst = arith.constant dense<0.000000e+00> : vector<8xf32>
    %3 = vector.multi_reduction <add>, %0, %cst [1] : vector<8x32xf32> to vector<8xf32>
    %4 = vector.shape_cast %3 : vector<8xf32> to vector<8x1xf32>
    %cst_5 = arith.constant 3.200000e+01 : f32
    %5 = vector.broadcast %cst_5 : f32 to vector<8x1xf32>
    %6 = arith.divf %4, %5 : vector<8x1xf32>
    %7 = vector.broadcast %6 : vector<8x1xf32> to vector<8x32xf32>
    %8 = arith.subf %0, %7 : vector<8x32xf32>
    %9 = arith.mulf %8, %8 : vector<8x32xf32>
    %cst_6 = arith.constant dense<0.000000e+00> : vector<8xf32>
    %10 = vector.multi_reduction <add>, %9, %cst_6 [1] : vector<8x32xf32> to vector<8xf32>
    %11 = vector.shape_cast %10 : vector<8xf32> to vector<8x1xf32>
    %cst_7 = arith.constant 3.200000e+01 : f32
    %12 = vector.broadcast %cst_7 : f32 to vector<8x1xf32>
    %13 = arith.divf %11, %12 : vector<8x1xf32>
    %14 = vector.broadcast %6 : vector<8x1xf32> to vector<8x32xf32>
    %15 = arith.subf %0, %14 : vector<8x32xf32>
    %cst_8 = arith.constant 9.99999974E-6 : f32
    %16 = vector.broadcast %cst_8 : f32 to vector<8x1xf32>
    %17 = arith.addf %13, %16 : vector<8x1xf32>
    %18 = math.rsqrt %17 : vector<8x1xf32>
    %19 = vector.broadcast %18 : vector<8x1xf32> to vector<8x32xf32>
    %20 = arith.mulf %15, %19 : vector<8x32xf32>
    %21 = vector.broadcast %1 : vector<1x32xf32> to vector<8x32xf32>
    %22 = arith.mulf %20, %21 : vector<8x32xf32>
    %23 = vector.broadcast %2 : vector<1x32xf32> to vector<8x32xf32>
    %24 = arith.addf %22, %23 : vector<8x32xf32>
    %25 = arith.truncf %24 : vector<8x32xf32> to vector<8x32xbf16>
    %c0_9 = arith.constant 0 : index
    %c0_10 = arith.constant 0 : index
    %26 = vector.load %arg4[%c0_9, %c0_10] : memref<32x128xbf16, #tpu.memory_space<vmem>>, vector<32x128xbf16>
    %cst_11 = arith.constant dense<0.000000e+00> : vector<8x128xf32>
    %27 = tpu.matmul %25, %26, %cst_11 {dimension_numbers = #tpu.dot_dimension_numbers<[1], [0], [0], [1], [0, 0, 1, 1], [], []>} : vector<8x32xbf16>, vector<32x128xbf16>, vector<8x128xf32> -> vector<8x128xf32>
    %c0_12 = arith.constant 0 : index
    %c0_13 = arith.constant 0 : index
    %28 = vector.load %arg5[%c0_12, %c0_13] : memref<1x128xf32, #tpu.memory_space<vmem>>, vector<1x128xf32>
    %29 = vector.broadcast %28 : vector<1x128xf32> to vector<8x128xf32>
    %30 = arith.addf %27, %29 : vector<8x128xf32>
    %cst_14 = arith.constant 0.000000e+00 : f32
    %31 = vector.broadcast %cst_14 : f32 to vector<8x128xf32>
    %32 = arith.maximumf %30, %31 : vector<8x128xf32>
    %33 = arith.truncf %32 : vector<8x128xf32> to vector<8x128xbf16>
    %c0_15 = arith.constant 0 : index
    %c0_16 = arith.constant 0 : index
    %34 = vector.load %arg6[%c0_15, %c0_16] : memref<128x32xbf16, #tpu.memory_space<vmem>>, vector<128x32xbf16>
    %cst_17 = arith.constant dense<0.000000e+00> : vector<8x32xf32>
    %35 = tpu.matmul %33, %34, %cst_17 {dimension_numbers = #tpu.dot_dimension_numbers<[1], [0], [0], [1], [0, 0, 1, 1], [], []>} : vector<8x128xbf16>, vector<128x32xbf16>, vector<8x32xf32> -> vector<8x32xf32>
    %c0_18 = arith.constant 0 : index
    %c0_19 = arith.constant 0 : index
    %36 = vector.load %arg7[%c0_18, %c0_19] : memref<1x32xf32, #tpu.memory_space<vmem>>, vector<1x32xf32>
    %37 = vector.broadcast %36 : vector<1x32xf32> to vector<8x32xf32>
    %38 = arith.addf %35, %37 : vector<8x32xf32>
    %39 = arith.addf %0, %38 : vector<8x32xf32>
    %c0_20 = arith.constant 0 : index
    %c0_21 = arith.constant 0 : index
    %40 = vector.load %arg8[%c0_20, %c0_21] : memref<8x32xf32, #tpu.memory_space<vmem>>, vector<8x32xf32>
    tpu.vector_store %arg8[%c0_20, %c0_21], %39 {strides = array<i32>} : memref<8x32xf32, #tpu.memory_space<vmem>>, vector<8x32xf32>,
    return
  }
  func.func @transform_0(%arg0: i32) -> (i32, i32) {
    %c0_i32 = arith.constant 0 : i32
    %c0_i32_0 = arith.constant 0 : i32
    return %arg0, %c0_i32 : i32, i32
  }
  func.func @transform_1(%arg0: i32) -> (i32, i32) {
    %c0_i32 = arith.constant 0 : i32
    %c0_i32_0 = arith.constant 0 : i32
    %c0_i32_1 = arith.constant 0 : i32
    return %c0_i32, %c0_i32_0 : i32, i32
  }
  func.func @transform_2(%arg0: i32) -> (i32, i32) {
    %c0_i32 = arith.constant 0 : i32
    %c0_i32_0 = arith.constant 0 : i32
    %c0_i32_1 = arith.constant 0 : i32
    return %c0_i32, %c0_i32_0 : i32, i32
  }
  func.func @transform_3(%arg0: i32) -> (i32, i32) {
    %c0_i32 = arith.constant 0 : i32
    %c0_i32_0 = arith.constant 0 : i32
    %c0_i32_1 = arith.constant 0 : i32
    return %c0_i32, %c0_i32_0 : i32, i32
  }
  func.func @transform_4(%arg0: i32) -> (i32, i32) {
    %c0_i32 = arith.constant 0 : i32
    %c0_i32_0 = arith.constant 0 : i32
    %c0_i32_1 = arith.constant 0 : i32
    return %c0_i32, %c0_i32_0 : i32, i32
  }
  func.func @transform_5(%arg0: i32) -> (i32, i32) {
    %c0_i32 = arith.constant 0 : i32
    %c0_i32_0 = arith.constant 0 : i32
    %c0_i32_1 = arith.constant 0 : i32
    return %c0_i32, %c0_i32_0 : i32, i32
  }
  func.func @transform_6(%arg0: i32) -> (i32, i32) {
    %c0_i32 = arith.constant 0 : i32
    %c0_i32_0 = arith.constant 0 : i32
    %c0_i32_1 = arith.constant 0 : i32
    return %c0_i32, %c0_i32_0 : i32, i32
  }
  func.func @transform_7(%arg0: i32) -> (i32, i32) {
    %c0_i32 = arith.constant 0 : i32
    %c0_i32_0 = arith.constant 0 : i32
    return %arg0, %c0_i32 : i32, i32
  }
}

module attributes {stable_mosaic.version = 11 : i64} {
  func.func @_final_kernel(%arg0: i32, %arg1: memref<8x32xf32, #tpu.memory_space<vmem>>, %arg2: memref<1x32xf32, #tpu.memory_space<vmem>>, %arg3: memref<1x32xf32, #tpu.memory_space<vmem>>, %arg4: memref<32x64xbf16, #tpu.memory_space<vmem>>, %arg5: memref<1x64xf32, #tpu.memory_space<vmem>>, %arg6: memref<8x64xf32, #tpu.memory_space<vmem>>) attributes {dimension_semantics = [#tpu.dimension_semantics<parallel>], iteration_bounds = array<i64: 2>, scalar_prefetch = 0 : i64, scratch_operands = 0 : i64, tpu.core_type = #tpu.core_type<tc>, window_params = [{transform_indices = @transform_0, window_bounds = array<i64: 8, 32>}, {pipeline_mode = #tpu.pipeline_mode<synchronous>, transform_indices = @transform_1, window_bounds = array<i64: 1, 32>}, {pipeline_mode = #tpu.pipeline_mode<synchronous>, transform_indices = @transform_2, window_bounds = array<i64: 1, 32>}, {pipeline_mode = #tpu.pipeline_mode<synchronous>, transform_indices = @transform_3, window_bounds = array<i64: 32, 64>}, {pipeline_mode = #tpu.pipeline_mode<synchronous>, transform_indices = @transform_4, window_bounds = array<i64: 1, 64>}, {transform_indices = @transform_5, window_bounds = array<i64: 8, 64>}]} {
    %c0 = arith.constant 0 : index
    %c0_0 = arith.constant 0 : index
    %0 = vector.load %arg1[%c0, %c0_0] : memref<8x32xf32, #tpu.memory_space<vmem>>, vector<8x32xf32>
    %c0_1 = arith.constant 0 : index
    %c0_2 = arith.constant 0 : index
    %1 = vector.load %arg2[%c0_1, %c0_2] : memref<1x32xf32, #tpu.memory_space<vmem>>, vector<1x32xf32>
    %c0_3 = arith.constant 0 : index
    %c0_4 = arith.constant 0 : index
    %2 = vector.load %arg3[%c0_3, %c0_4] : memref<1x32xf32, #tpu.memory_space<vmem>>, vector<1x32xf32>
    %cst = arith.constant dense<0.000000e+00> : vector<8xf32>
    %3 = vector.multi_reduction <add>, %0, %cst [1] : vector<8x32xf32> to vector<8xf32>
    %4 = vector.shape_cast %3 : vector<8xf32> to vector<8x1xf32>
    %cst_5 = arith.constant 3.200000e+01 : f32
    %5 = vector.broadcast %cst_5 : f32 to vector<8x1xf32>
    %6 = arith.divf %4, %5 : vector<8x1xf32>
    %7 = vector.broadcast %6 : vector<8x1xf32> to vector<8x32xf32>
    %8 = arith.subf %0, %7 : vector<8x32xf32>
    %9 = arith.mulf %8, %8 : vector<8x32xf32>
    %cst_6 = arith.constant dense<0.000000e+00> : vector<8xf32>
    %10 = vector.multi_reduction <add>, %9, %cst_6 [1] : vector<8x32xf32> to vector<8xf32>
    %11 = vector.shape_cast %10 : vector<8xf32> to vector<8x1xf32>
    %cst_7 = arith.constant 3.200000e+01 : f32
    %12 = vector.broadcast %cst_7 : f32 to vector<8x1xf32>
    %13 = arith.divf %11, %12 : vector<8x1xf32>
    %14 = vector.broadcast %6 : vector<8x1xf32> to vector<8x32xf32>
    %15 = arith.subf %0, %14 : vector<8x32xf32>
    %cst_8 = arith.constant 9.99999974E-6 : f32
    %16 = vector.broadcast %cst_8 : f32 to vector<8x1xf32>
    %17 = arith.addf %13, %16 : vector<8x1xf32>
    %18 = math.rsqrt %17 : vector<8x1xf32>
    %19 = vector.broadcast %18 : vector<8x1xf32> to vector<8x32xf32>
    %20 = arith.mulf %15, %19 : vector<8x32xf32>
    %21 = vector.broadcast %1 : vector<1x32xf32> to vector<8x32xf32>
    %22 = arith.mulf %20, %21 : vector<8x32xf32>
    %23 = vector.broadcast %2 : vector<1x32xf32> to vector<8x32xf32>
    %24 = arith.addf %22, %23 : vector<8x32xf32>
    %25 = arith.truncf %24 : vector<8x32xf32> to vector<8x32xbf16>
    %c0_9 = arith.constant 0 : index
    %c0_10 = arith.constant 0 : index
    %26 = vector.load %arg4[%c0_9, %c0_10] : memref<32x64xbf16, #tpu.memory_space<vmem>>, vector<32x64xbf16>
    %cst_11 = arith.constant dense<0.000000e+00> : vector<8x64xf32>
    %27 = tpu.matmul %25, %26, %cst_11 {dimension_numbers = #tpu.dot_dimension_numbers<[1], [0], [0], [1], [0, 0, 1, 1], [], []>} : vector<8x32xbf16>, vector<32x64xbf16>, vector<8x64xf32> -> vector<8x64xf32>
    %c0_12 = arith.constant 0 : index
    %c0_13 = arith.constant 0 : index
    %28 = vector.load %arg5[%c0_12, %c0_13] : memref<1x64xf32, #tpu.memory_space<vmem>>, vector<1x64xf32>
    %29 = vector.broadcast %28 : vector<1x64xf32> to vector<8x64xf32>
    %30 = arith.addf %27, %29 : vector<8x64xf32>
    %c0_14 = arith.constant 0 : index
    %c0_15 = arith.constant 0 : index
    %31 = vector.load %arg6[%c0_14, %c0_15] : memref<8x64xf32, #tpu.memory_space<vmem>>, vector<8x64xf32>
    tpu.vector_store %arg6[%c0_14, %c0_15], %30 {strides = array<i32>} : memref<8x64xf32, #tpu.memory_space<vmem>>, vector<8x64xf32>,
    return
  }
  func.func @transform_0(%arg0: i32) -> (i32, i32) {
    %c0_i32 = arith.constant 0 : i32
    %c0_i32_0 = arith.constant 0 : i32
    return %arg0, %c0_i32 : i32, i32
  }
  func.func @transform_1(%arg0: i32) -> (i32, i32) {
    %c0_i32 = arith.constant 0 : i32
    %c0_i32_0 = arith.constant 0 : i32
    %c0_i32_1 = arith.constant 0 : i32
    return %c0_i32, %c0_i32_0 : i32, i32
  }
  func.func @transform_2(%arg0: i32) -> (i32, i32) {
    %c0_i32 = arith.constant 0 : i32
    %c0_i32_0 = arith.constant 0 : i32
    %c0_i32_1 = arith.constant 0 : i32
    return %c0_i32, %c0_i32_0 : i32, i32
  }
  func.func @transform_3(%arg0: i32) -> (i32, i32) {
    %c0_i32 = arith.constant 0 : i32
    %c0_i32_0 = arith.constant 0 : i32
    %c0_i32_1 = arith.constant 0 : i32
    return %c0_i32, %c0_i32_0 : i32, i32
  }
  func.func @transform_4(%arg0: i32) -> (i32, i32) {
    %c0_i32 = arith.constant 0 : i32
    %c0_i32_0 = arith.constant 0 : i32
    %c0_i32_1 = arith.constant 0 : i32
    return %c0_i32, %c0_i32_0 : i32, i32
  }
  func.func @transform_5(%arg0: i32) -> (i32, i32) {
    %c0_i32 = arith.constant 0 : i32
    %c0_i32_0 = arith.constant 0 : i32
    return %arg0, %c0_i32 : i32, i32
  }
}

module attributes {stable_mosaic.version = 11 : i64} {
  func.func @_attn_block_kernel(%arg0: i32, %arg1: memref<1x8x32xf32, #tpu.memory_space<vmem>>, %arg2: memref<1x32xf32, #tpu.memory_space<vmem>>, %arg3: memref<1x32xf32, #tpu.memory_space<vmem>>, %arg4: memref<32x96xbf16, #tpu.memory_space<vmem>>, %arg5: memref<32x32xbf16, #tpu.memory_space<vmem>>, %arg6: memref<1x32xf32, #tpu.memory_space<vmem>>, %arg7: memref<1x8x32xf32, #tpu.memory_space<vmem>>) attributes {dimension_semantics = [#tpu.dimension_semantics<parallel>], iteration_bounds = array<i64: 2>, scalar_prefetch = 0 : i64, scratch_operands = 0 : i64, tpu.core_type = #tpu.core_type<tc>, window_params = [{transform_indices = @transform_0, window_bounds = array<i64: 1, 8, 32>}, {pipeline_mode = #tpu.pipeline_mode<synchronous>, transform_indices = @transform_1, window_bounds = array<i64: 1, 32>}, {pipeline_mode = #tpu.pipeline_mode<synchronous>, transform_indices = @transform_2, window_bounds = array<i64: 1, 32>}, {pipeline_mode = #tpu.pipeline_mode<synchronous>, transform_indices = @transform_3, window_bounds = array<i64: 32, 96>}, {pipeline_mode = #tpu.pipeline_mode<synchronous>, transform_indices = @transform_4, window_bounds = array<i64: 32, 32>}, {pipeline_mode = #tpu.pipeline_mode<synchronous>, transform_indices = @transform_5, window_bounds = array<i64: 1, 32>}, {transform_indices = @transform_6, window_bounds = array<i64: 1, 8, 32>}]} {
    %c0 = arith.constant 0 : index
    %c0_0 = arith.constant 0 : index
    %c0_1 = arith.constant 0 : index
    %0 = vector.load %arg1[%c0, %c0_0, %c0_1] : memref<1x8x32xf32, #tpu.memory_space<vmem>>, vector<1x8x32xf32>
    %1 = vector.shape_cast %0 : vector<1x8x32xf32> to vector<8x32xf32>
    %c0_2 = arith.constant 0 : index
    %c0_3 = arith.constant 0 : index
    %2 = vector.load %arg2[%c0_2, %c0_3] : memref<1x32xf32, #tpu.memory_space<vmem>>, vector<1x32xf32>
    %c0_4 = arith.constant 0 : index
    %c0_5 = arith.constant 0 : index
    %3 = vector.load %arg3[%c0_4, %c0_5] : memref<1x32xf32, #tpu.memory_space<vmem>>, vector<1x32xf32>
    %cst = arith.constant dense<0.000000e+00> : vector<8xf32>
    %4 = vector.multi_reduction <add>, %1, %cst [1] : vector<8x32xf32> to vector<8xf32>
    %5 = vector.shape_cast %4 : vector<8xf32> to vector<8x1xf32>
    %cst_6 = arith.constant 3.200000e+01 : f32
    %6 = vector.broadcast %cst_6 : f32 to vector<8x1xf32>
    %7 = arith.divf %5, %6 : vector<8x1xf32>
    %8 = vector.broadcast %7 : vector<8x1xf32> to vector<8x32xf32>
    %9 = arith.subf %1, %8 : vector<8x32xf32>
    %10 = arith.mulf %9, %9 : vector<8x32xf32>
    %cst_7 = arith.constant dense<0.000000e+00> : vector<8xf32>
    %11 = vector.multi_reduction <add>, %10, %cst_7 [1] : vector<8x32xf32> to vector<8xf32>
    %12 = vector.shape_cast %11 : vector<8xf32> to vector<8x1xf32>
    %cst_8 = arith.constant 3.200000e+01 : f32
    %13 = vector.broadcast %cst_8 : f32 to vector<8x1xf32>
    %14 = arith.divf %12, %13 : vector<8x1xf32>
    %15 = vector.broadcast %7 : vector<8x1xf32> to vector<8x32xf32>
    %16 = arith.subf %1, %15 : vector<8x32xf32>
    %cst_9 = arith.constant 9.99999974E-6 : f32
    %17 = vector.broadcast %cst_9 : f32 to vector<8x1xf32>
    %18 = arith.addf %14, %17 : vector<8x1xf32>
    %19 = math.rsqrt %18 : vector<8x1xf32>
    %20 = vector.broadcast %19 : vector<8x1xf32> to vector<8x32xf32>
    %21 = arith.mulf %16, %20 : vector<8x32xf32>
    %22 = vector.broadcast %2 : vector<1x32xf32> to vector<8x32xf32>
    %23 = arith.mulf %21, %22 : vector<8x32xf32>
    %24 = vector.broadcast %3 : vector<1x32xf32> to vector<8x32xf32>
    %25 = arith.addf %23, %24 : vector<8x32xf32>
    %26 = arith.truncf %25 : vector<8x32xf32> to vector<8x32xbf16>
    %c0_10 = arith.constant 0 : index
    %c0_11 = arith.constant 0 : index
    %27 = vector.load %arg4[%c0_10, %c0_11] : memref<32x96xbf16, #tpu.memory_space<vmem>>, vector<32x96xbf16>
    %cst_12 = arith.constant dense<0.000000e+00> : vector<8x96xf32>
    %28 = tpu.matmul %26, %27, %cst_12 {dimension_numbers = #tpu.dot_dimension_numbers<[1], [0], [0], [1], [0, 0, 1, 1], [], []>} : vector<8x32xbf16>, vector<32x96xbf16>, vector<8x96xf32> -> vector<8x96xf32>
    %29 = vector.extract_strided_slice %28 {offsets = [0, 0], sizes = [8, 32], strides = [1, 1]} : vector<8x96xf32> to vector<8x32xf32>
    %30 = vector.extract_strided_slice %28 {offsets = [0, 32], sizes = [8, 32], strides = [1, 1]} : vector<8x96xf32> to vector<8x32xf32>
    %31 = vector.extract_strided_slice %28 {offsets = [0, 64], sizes = [8, 32], strides = [1, 1]} : vector<8x96xf32> to vector<8x32xf32>
    %cst_13 = arith.constant 0.000000e+00 : f32
    %32 = vector.broadcast %cst_13 : f32 to vector<8x32xf32>
    %33 = vector.extract_strided_slice %29 {offsets = [0, 0], sizes = [8, 8], strides = [1, 1]} : vector<8x32xf32> to vector<8x8xf32>
    %34 = arith.truncf %33 : vector<8x8xf32> to vector<8x8xbf16>
    %35 = vector.extract_strided_slice %30 {offsets = [0, 0], sizes = [8, 8], strides = [1, 1]} : vector<8x32xf32> to vector<8x8xf32>
    %36 = arith.truncf %35 : vector<8x8xf32> to vector<8x8xbf16>
    %37 = vector.extract_strided_slice %31 {offsets = [0, 0], sizes = [8, 8], strides = [1, 1]} : vector<8x32xf32> to vector<8x8xf32>
    %38 = arith.truncf %37 : vector<8x8xf32> to vector<8x8xbf16>
    %cst_14 = arith.constant dense<0.000000e+00> : vector<8x8xf32>
    %39 = tpu.matmul %34, %36, %cst_14 {dimension_numbers = #tpu.dot_dimension_numbers<[1], [1], [0], [0], [0, 0, 1, 0], [], []>} : vector<8x8xbf16>, vector<8x8xbf16>, vector<8x8xf32> -> vector<8x8xf32>
    %cst_15 = arith.constant 0.176776692 : f32
    %40 = vector.broadcast %cst_15 : f32 to vector<8x8xf32>
    %41 = arith.mulf %39, %40 : vector<8x8xf32>
    %cst_16 = arith.constant dense<0xFF800000> : vector<8xf32>
    %42 = vector.multi_reduction <maximumf>, %41, %cst_16 [1] : vector<8x8xf32> to vector<8xf32>
    %43 = vector.shape_cast %42 : vector<8xf32> to vector<8x1xf32>
    %44 = vector.broadcast %43 : vector<8x1xf32> to vector<8x8xf32>
    %45 = arith.subf %41, %44 : vector<8x8xf32>
    %46 = math.exp %45 : vector<8x8xf32>
    %cst_17 = arith.constant dense<0.000000e+00> : vector<8xf32>
    %47 = vector.multi_reduction <add>, %46, %cst_17 [1] : vector<8x8xf32> to vector<8xf32>
    %48 = vector.shape_cast %47 : vector<8xf32> to vector<8x1xf32>
    %49 = vector.broadcast %48 : vector<8x1xf32> to vector<8x8xf32>
    %50 = arith.divf %46, %49 : vector<8x8xf32>
    %51 = arith.truncf %50 : vector<8x8xf32> to vector<8x8xbf16>
    %cst_18 = arith.constant dense<0.000000e+00> : vector<8x8xf32>
    %52 = tpu.matmul %51, %38, %cst_18 {dimension_numbers = #tpu.dot_dimension_numbers<[1], [0], [0], [1], [0, 0, 1, 1], [], []>} : vector<8x8xbf16>, vector<8x8xbf16>, vector<8x8xf32> -> vector<8x8xf32>
    %53 = arith.truncf %52 : vector<8x8xf32> to vector<8x8xbf16>
    %c0_19 = arith.constant 0 : index
    %c0_20 = arith.constant 0 : index
    %54 = vector.load %arg5[%c0_19, %c0_20] : memref<32x32xbf16, #tpu.memory_space<vmem>>, vector<8x32xbf16>
    %cst_21 = arith.constant dense<0.000000e+00> : vector<8x32xf32>
    %55 = tpu.matmul %53, %54, %cst_21 {dimension_numbers = #tpu.dot_dimension_numbers<[1], [0], [0], [1], [0, 0, 1, 1], [], []>} : vector<8x8xbf16>, vector<8x32xbf16>, vector<8x32xf32> -> vector<8x32xf32>
    %56 = arith.addf %32, %55 : vector<8x32xf32>
    %57 = vector.extract_strided_slice %29 {offsets = [0, 8], sizes = [8, 8], strides = [1, 1]} : vector<8x32xf32> to vector<8x8xf32>
    %58 = arith.truncf %57 : vector<8x8xf32> to vector<8x8xbf16>
    %59 = vector.extract_strided_slice %30 {offsets = [0, 8], sizes = [8, 8], strides = [1, 1]} : vector<8x32xf32> to vector<8x8xf32>
    %60 = arith.truncf %59 : vector<8x8xf32> to vector<8x8xbf16>
    %61 = vector.extract_strided_slice %31 {offsets = [0, 8], sizes = [8, 8], strides = [1, 1]} : vector<8x32xf32> to vector<8x8xf32>
    %62 = arith.truncf %61 : vector<8x8xf32> to vector<8x8xbf16>
    %cst_22 = arith.constant dense<0.000000e+00> : vector<8x8xf32>
    %63 = tpu.matmul %58, %60, %cst_22 {dimension_numbers = #tpu.dot_dimension_numbers<[1], [1], [0], [0], [0, 0, 1, 0], [], []>} : vector<8x8xbf16>, vector<8x8xbf16>, vector<8x8xf32> -> vector<8x8xf32>
    %cst_23 = arith.constant 0.176776692 : f32
    %64 = vector.broadcast %cst_23 : f32 to vector<8x8xf32>
    %65 = arith.mulf %63, %64 : vector<8x8xf32>
    %cst_24 = arith.constant dense<0xFF800000> : vector<8xf32>
    %66 = vector.multi_reduction <maximumf>, %65, %cst_24 [1] : vector<8x8xf32> to vector<8xf32>
    %67 = vector.shape_cast %66 : vector<8xf32> to vector<8x1xf32>
    %68 = vector.broadcast %67 : vector<8x1xf32> to vector<8x8xf32>
    %69 = arith.subf %65, %68 : vector<8x8xf32>
    %70 = math.exp %69 : vector<8x8xf32>
    %cst_25 = arith.constant dense<0.000000e+00> : vector<8xf32>
    %71 = vector.multi_reduction <add>, %70, %cst_25 [1] : vector<8x8xf32> to vector<8xf32>
    %72 = vector.shape_cast %71 : vector<8xf32> to vector<8x1xf32>
    %73 = vector.broadcast %72 : vector<8x1xf32> to vector<8x8xf32>
    %74 = arith.divf %70, %73 : vector<8x8xf32>
    %75 = arith.truncf %74 : vector<8x8xf32> to vector<8x8xbf16>
    %cst_26 = arith.constant dense<0.000000e+00> : vector<8x8xf32>
    %76 = tpu.matmul %75, %62, %cst_26 {dimension_numbers = #tpu.dot_dimension_numbers<[1], [0], [0], [1], [0, 0, 1, 1], [], []>} : vector<8x8xbf16>, vector<8x8xbf16>, vector<8x8xf32> -> vector<8x8xf32>
    %77 = arith.truncf %76 : vector<8x8xf32> to vector<8x8xbf16>
    %c8 = arith.constant 8 : index
    %c0_27 = arith.constant 0 : index
    %78 = vector.load %arg5[%c8, %c0_27] : memref<32x32xbf16, #tpu.memory_space<vmem>>, vector<8x32xbf16>
    %cst_28 = arith.constant dense<0.000000e+00> : vector<8x32xf32>
    %79 = tpu.matmul %77, %78, %cst_28 {dimension_numbers = #tpu.dot_dimension_numbers<[1], [0], [0], [1], [0, 0, 1, 1], [], []>} : vector<8x8xbf16>, vector<8x32xbf16>, vector<8x32xf32> -> vector<8x32xf32>
    %80 = arith.addf %56, %79 : vector<8x32xf32>
    %81 = vector.extract_strided_slice %29 {offsets = [0, 16], sizes = [8, 8], strides = [1, 1]} : vector<8x32xf32> to vector<8x8xf32>
    %82 = arith.truncf %81 : vector<8x8xf32> to vector<8x8xbf16>
    %83 = vector.extract_strided_slice %30 {offsets = [0, 16], sizes = [8, 8], strides = [1, 1]} : vector<8x32xf32> to vector<8x8xf32>
    %84 = arith.truncf %83 : vector<8x8xf32> to vector<8x8xbf16>
    %85 = vector.extract_strided_slice %31 {offsets = [0, 16], sizes = [8, 8], strides = [1, 1]} : vector<8x32xf32> to vector<8x8xf32>
    %86 = arith.truncf %85 : vector<8x8xf32> to vector<8x8xbf16>
    %cst_29 = arith.constant dense<0.000000e+00> : vector<8x8xf32>
    %87 = tpu.matmul %82, %84, %cst_29 {dimension_numbers = #tpu.dot_dimension_numbers<[1], [1], [0], [0], [0, 0, 1, 0], [], []>} : vector<8x8xbf16>, vector<8x8xbf16>, vector<8x8xf32> -> vector<8x8xf32>
    %cst_30 = arith.constant 0.176776692 : f32
    %88 = vector.broadcast %cst_30 : f32 to vector<8x8xf32>
    %89 = arith.mulf %87, %88 : vector<8x8xf32>
    %cst_31 = arith.constant dense<0xFF800000> : vector<8xf32>
    %90 = vector.multi_reduction <maximumf>, %89, %cst_31 [1] : vector<8x8xf32> to vector<8xf32>
    %91 = vector.shape_cast %90 : vector<8xf32> to vector<8x1xf32>
    %92 = vector.broadcast %91 : vector<8x1xf32> to vector<8x8xf32>
    %93 = arith.subf %89, %92 : vector<8x8xf32>
    %94 = math.exp %93 : vector<8x8xf32>
    %cst_32 = arith.constant dense<0.000000e+00> : vector<8xf32>
    %95 = vector.multi_reduction <add>, %94, %cst_32 [1] : vector<8x8xf32> to vector<8xf32>
    %96 = vector.shape_cast %95 : vector<8xf32> to vector<8x1xf32>
    %97 = vector.broadcast %96 : vector<8x1xf32> to vector<8x8xf32>
    %98 = arith.divf %94, %97 : vector<8x8xf32>
    %99 = arith.truncf %98 : vector<8x8xf32> to vector<8x8xbf16>
    %cst_33 = arith.constant dense<0.000000e+00> : vector<8x8xf32>
    %100 = tpu.matmul %99, %86, %cst_33 {dimension_numbers = #tpu.dot_dimension_numbers<[1], [0], [0], [1], [0, 0, 1, 1], [], []>} : vector<8x8xbf16>, vector<8x8xbf16>, vector<8x8xf32> -> vector<8x8xf32>
    %101 = arith.truncf %100 : vector<8x8xf32> to vector<8x8xbf16>
    %c16 = arith.constant 16 : index
    %c0_34 = arith.constant 0 : index
    %102 = vector.load %arg5[%c16, %c0_34] : memref<32x32xbf16, #tpu.memory_space<vmem>>, vector<8x32xbf16>
    %cst_35 = arith.constant dense<0.000000e+00> : vector<8x32xf32>
    %103 = tpu.matmul %101, %102, %cst_35 {dimension_numbers = #tpu.dot_dimension_numbers<[1], [0], [0], [1], [0, 0, 1, 1], [], []>} : vector<8x8xbf16>, vector<8x32xbf16>, vector<8x32xf32> -> vector<8x32xf32>
    %104 = arith.addf %80, %103 : vector<8x32xf32>
    %105 = vector.extract_strided_slice %29 {offsets = [0, 24], sizes = [8, 8], strides = [1, 1]} : vector<8x32xf32> to vector<8x8xf32>
    %106 = arith.truncf %105 : vector<8x8xf32> to vector<8x8xbf16>
    %107 = vector.extract_strided_slice %30 {offsets = [0, 24], sizes = [8, 8], strides = [1, 1]} : vector<8x32xf32> to vector<8x8xf32>
    %108 = arith.truncf %107 : vector<8x8xf32> to vector<8x8xbf16>
    %109 = vector.extract_strided_slice %31 {offsets = [0, 24], sizes = [8, 8], strides = [1, 1]} : vector<8x32xf32> to vector<8x8xf32>
    %110 = arith.truncf %109 : vector<8x8xf32> to vector<8x8xbf16>
    %cst_36 = arith.constant dense<0.000000e+00> : vector<8x8xf32>
    %111 = tpu.matmul %106, %108, %cst_36 {dimension_numbers = #tpu.dot_dimension_numbers<[1], [1], [0], [0], [0, 0, 1, 0], [], []>} : vector<8x8xbf16>, vector<8x8xbf16>, vector<8x8xf32> -> vector<8x8xf32>
    %cst_37 = arith.constant 0.176776692 : f32
    %112 = vector.broadcast %cst_37 : f32 to vector<8x8xf32>
    %113 = arith.mulf %111, %112 : vector<8x8xf32>
    %cst_38 = arith.constant dense<0xFF800000> : vector<8xf32>
    %114 = vector.multi_reduction <maximumf>, %113, %cst_38 [1] : vector<8x8xf32> to vector<8xf32>
    %115 = vector.shape_cast %114 : vector<8xf32> to vector<8x1xf32>
    %116 = vector.broadcast %115 : vector<8x1xf32> to vector<8x8xf32>
    %117 = arith.subf %113, %116 : vector<8x8xf32>
    %118 = math.exp %117 : vector<8x8xf32>
    %cst_39 = arith.constant dense<0.000000e+00> : vector<8xf32>
    %119 = vector.multi_reduction <add>, %118, %cst_39 [1] : vector<8x8xf32> to vector<8xf32>
    %120 = vector.shape_cast %119 : vector<8xf32> to vector<8x1xf32>
    %121 = vector.broadcast %120 : vector<8x1xf32> to vector<8x8xf32>
    %122 = arith.divf %118, %121 : vector<8x8xf32>
    %123 = arith.truncf %122 : vector<8x8xf32> to vector<8x8xbf16>
    %cst_40 = arith.constant dense<0.000000e+00> : vector<8x8xf32>
    %124 = tpu.matmul %123, %110, %cst_40 {dimension_numbers = #tpu.dot_dimension_numbers<[1], [0], [0], [1], [0, 0, 1, 1], [], []>} : vector<8x8xbf16>, vector<8x8xbf16>, vector<8x8xf32> -> vector<8x8xf32>
    %125 = arith.truncf %124 : vector<8x8xf32> to vector<8x8xbf16>
    %c24 = arith.constant 24 : index
    %c0_41 = arith.constant 0 : index
    %126 = vector.load %arg5[%c24, %c0_41] : memref<32x32xbf16, #tpu.memory_space<vmem>>, vector<8x32xbf16>
    %cst_42 = arith.constant dense<0.000000e+00> : vector<8x32xf32>
    %127 = tpu.matmul %125, %126, %cst_42 {dimension_numbers = #tpu.dot_dimension_numbers<[1], [0], [0], [1], [0, 0, 1, 1], [], []>} : vector<8x8xbf16>, vector<8x32xbf16>, vector<8x32xf32> -> vector<8x32xf32>
    %128 = arith.addf %104, %127 : vector<8x32xf32>
    %c0_43 = arith.constant 0 : index
    %c0_44 = arith.constant 0 : index
    %129 = vector.load %arg6[%c0_43, %c0_44] : memref<1x32xf32, #tpu.memory_space<vmem>>, vector<1x32xf32>
    %130 = vector.broadcast %129 : vector<1x32xf32> to vector<8x32xf32>
    %131 = arith.addf %128, %130 : vector<8x32xf32>
    %132 = arith.addf %1, %131 : vector<8x32xf32>
    %c0_45 = arith.constant 0 : index
    %c0_46 = arith.constant 0 : index
    %c0_47 = arith.constant 0 : index
    %133 = vector.load %arg7[%c0_45, %c0_46, %c0_47] : memref<1x8x32xf32, #tpu.memory_space<vmem>>, vector<1x8x32xf32>
    %134 = vector.shape_cast %133 : vector<1x8x32xf32> to vector<8x32xf32>
    %135 = vector.shape_cast %132 : vector<8x32xf32> to vector<1x8x32xf32>
    tpu.vector_store %arg7[%c0_45, %c0_46, %c0_47], %135 {strides = array<i32>} : memref<1x8x32xf32, #tpu.memory_space<vmem>>, vector<1x8x32xf32>,
    return
  }
  func.func @transform_0(%arg0: i32) -> (i32, i32, i32) {
    %c0_i32 = arith.constant 0 : i32
    %c0_i32_0 = arith.constant 0 : i32
    %c0_i32_1 = arith.constant 0 : i32
    return %arg0, %c0_i32, %c0_i32_0 : i32, i32, i32
  }
  func.func @transform_1(%arg0: i32) -> (i32, i32) {
    %c0_i32 = arith.constant 0 : i32
    %c0_i32_0 = arith.constant 0 : i32
    %c0_i32_1 = arith.constant 0 : i32
    return %c0_i32, %c0_i32_0 : i32, i32
  }
  func.func @transform_2(%arg0: i32) -> (i32, i32) {
    %c0_i32 = arith.constant 0 : i32
    %c0_i32_0 = arith.constant 0 : i32
    %c0_i32_1 = arith.constant 0 : i32
    return %c0_i32, %c0_i32_0 : i32, i32
  }
  func.func @transform_3(%arg0: i32) -> (i32, i32) {
    %c0_i32 = arith.constant 0 : i32
    %c0_i32_0 = arith.constant 0 : i32
    %c0_i32_1 = arith.constant 0 : i32
    return %c0_i32, %c0_i32_0 : i32, i32
  }
  func.func @transform_4(%arg0: i32) -> (i32, i32) {
    %c0_i32 = arith.constant 0 : i32
    %c0_i32_0 = arith.constant 0 : i32
    %c0_i32_1 = arith.constant 0 : i32
    return %c0_i32, %c0_i32_0 : i32, i32
  }
  func.func @transform_5(%arg0: i32) -> (i32, i32) {
    %c0_i32 = arith.constant 0 : i32
    %c0_i32_0 = arith.constant 0 : i32
    %c0_i32_1 = arith.constant 0 : i32
    return %c0_i32, %c0_i32_0 : i32, i32
  }
  func.func @transform_6(%arg0: i32) -> (i32, i32, i32) {
    %c0_i32 = arith.constant 0 : i32
    %c0_i32_0 = arith.constant 0 : i32
    %c0_i32_1 = arith.constant 0 : i32
    return %arg0, %c0_i32, %c0_i32_0 : i32, i32, i32
  }
}

</mosaic_0001>

<llo_original>
// kernel: bert_forward.9
$region0: #{bert_forward.9}
  #allocation0 [shape = 'u32[]', space=smem, size = 0x4, offset = 0x4, fixed_abs, tag = 'smem constant byte address 0x4 - core index']
  #allocation1 [shape = 'u32[144,128]{1,0:T(1,128)}', space=vmem, size = 0x12000, scoped, tag = 'internal scratch']
  %s0 = inlined_call_operand.vmem [shape: f32[16,32], index: 0, kind: input, shape index: {}]
  %s1 = inlined_call_operand.vmem [shape: f32[1,32], index: 1, kind: input, shape index: {}]
  %s2 = inlined_call_operand.vmem [shape: f32[1,32], index: 2, kind: input, shape index: {}]
  %s3 = inlined_call_operand.vmem [shape: bf16[32,64], index: 3, kind: input, shape index: {}]
  %s4 = inlined_call_operand.vmem [shape: f32[1,64], index: 4, kind: input, shape index: {}]
  %s5 = inlined_call_operand.hbm [shape: f32[16,64], index: 5, kind: output, shape index: {}]
  %s6 = sld [smem:[#allocation0]]
  $region53: #{bert_forward.9} parent=0
    _
  %s8 = ssub.s32 1, %s6
  %s9 = scalar_select 0, %s8, %s6
  $region1: #{bert_forward.9} parent=0
    #allocation2 [shape = 'u8[8192]{0}', space=vmem, size = 0x2000, scoped, tag = 'output window, operand 0']
    #allocation3 [shape = 's32[2]{0}', space=sflag, size = 0x8, scoped, tag = 'scoped memory for bert_forward.9']
    %10 = vsyncpa [#allocation3], 0
    %s11 = scalar_lea.sflag [#allocation3], 1
    %12 = vsyncpa %s11, 0
    loop: start=0, step=1, limit=4
    $region2: #{bert_forward.9} parent=1 // loop_pre_header
      _
    $region3: #{bert_forward.9} parent=1 // loop_header
      %s14 = sphi 0, %s18
      %p15 = scmp.ge.s32.totalorder %s14, 4
      %s24 = sphi 0, %s26
      %s27 = sphi 0, %s24
      %s28 = sphi 0, %s27
      %s44 = sphi 0, %s28
      %s48 = sphi 0, %s48
      %s50 = sphi 0, %s48
      %s51 = sphi 0, %s50
      %s65 = sphi 0, %s51
      %s69 = sphi 0, %s69
      %s71 = sphi 0, %s69
      %s72 = sphi 0, %s71
      %s86 = sphi 0, %s72
      %s90 = sphi 0, %s90
      %s92 = sphi 0, %s90
      %s93 = sphi 0, %s92
      %s107 = sphi 0, %s93
      %s111 = sphi 0, %s111
      %s113 = sphi 0, %s111
      %s114 = sphi 0, %s113
      %s128 = sphi 0, %s114
      %s134 = sphi 0, %s136
      %s137 = sphi 0, %s134
      %s138 = sphi 0, %s137
      %s154 = sphi 0, %s138
    $region4: #{bert_forward.9} parent=1 // loop_header_branch
      %17 = sbr.rel (%p15) target = $region8
    $region5: #{bert_forward.9} parent=1 // loop_body
      %s19 = ssub.s32 %s14, 1
      %s20 = ssub.s32 %s14, 2
      %s21 = sadd.s32 %s14, 1
      %s22 = ssub.s32 %s14, %s21
      %p23 = scmp.eq.s32.totalorder %s22, 0
      %s25 = sadd.s32 %s24, 1
      %s26 = scalar_select %p23, %s24, %s25
      %p29 = pneg %p23
      %p30 = scmp.eq.s32.totalorder %s14, 1
      %p31 = por %p29, %p30
      %p32 = scmp.ne.s32.totalorder %s24, %s27
      %p33 = scmp.eq.s32.totalorder %s14, 0
      %p34 = por %p32, %p33
      %p35 = scmp.ne.s32.totalorder %s24, %s27
      %p36 = scmp.eq.s32.totalorder %s19, 1
      %p37 = por %p35, %p36
      %p38 = scmp.ne.s32.totalorder %s27, %s28
      %p39 = scmp.eq.s32.totalorder %s19, 0
      %p40 = por %p38, %p39
      %p41 = scmp.ne.s32.totalorder %s27, %s28
      %p42 = scmp.eq.s32.totalorder %s20, 1
      %p43 = por %p41, %p42
      %p45 = scmp.ne.s32.totalorder %s28, %s44
      %p46 = scmp.eq.s32.totalorder %s20, 0
      %p47 = por %p45, %p46
      %s49 = sadd.s32 %s48, 1
      %p52 = scmp.eq.s32.totalorder %s14, 1
      %p53 = scmp.ne.s32.totalorder %s48, %s50
      %p54 = scmp.eq.s32.totalorder %s14, 0
      %p55 = por %p53, %p54
      %p56 = scmp.ne.s32.totalorder %s48, %s50
      %p57 = scmp.eq.s32.totalorder %s19, 1
      %p58 = por %p56, %p57
      %p59 = scmp.ne.s32.totalorder %s50, %s51
      %p60 = scmp.eq.s32.totalorder %s19, 0
      %p61 = por %p59, %p60
      %p62 = scmp.ne.s32.totalorder %s50, %s51
      %p63 = scmp.eq.s32.totalorder %s20, 1
      %p64 = por %p62, %p63
      %p66 = scmp.ne.s32.totalorder %s51, %s65
      %p67 = scmp.eq.s32.totalorder %s20, 0
      %p68 = por %p66, %p67
      %s70 = sadd.s32 %s69, 1
      %p73 = scmp.eq.s32.totalorder %s14, 1
      %p74 = scmp.ne.s32.totalorder %s69, %s71
      %p75 = scmp.eq.s32.totalorder %s14, 0
      %p76 = por %p74, %p75
      %p77 = scmp.ne.s32.totalorder %s69, %s71
      %p78 = scmp.eq.s32.totalorder %s19, 1
      %p79 = por %p77, %p78
      %p80 = scmp.ne.s32.totalorder %s71, %s72
      %p81 = scmp.eq.s32.totalorder %s19, 0
      %p82 = por %p80, %p81
      %p83 = scmp.ne.s32.totalorder %s71, %s72
      %p84 = scmp.eq.s32.totalorder %s20, 1
      %p85 = por %p83, %p84
      %p87 = scmp.ne.s32.totalorder %s72, %s86
      %p88 = scmp.eq.s32.totalorder %s20, 0
      %p89 = por %p87, %p88
      %s91 = sadd.s32 %s90, 1
      %p94 = scmp.eq.s32.totalorder %s14, 1
      %p95 = scmp.ne.s32.totalorder %s90, %s92
      %p96 = scmp.eq.s32.totalorder %s14, 0
      %p97 = por %p95, %p96
      %p98 = scmp.ne.s32.totalorder %s90, %s92
      %p99 = scmp.eq.s32.totalorder %s19, 1
      %p100 = por %p98, %p99
      %p101 = scmp.ne.s32.totalorder %s92, %s93
      %p102 = scmp.eq.s32.totalorder %s19, 0
      %p103 = por %p101, %p102
      %p104 = scmp.ne.s32.totalorder %s92, %s93
      %p105 = scmp.eq.s32.totalorder %s20, 1
      %p106 = por %p104, %p105
      %p108 = scmp.ne.s32.totalorder %s93, %s107
      %p109 = scmp.eq.s32.totalorder %s20, 0
      %p110 = por %p108, %p109
      %s112 = sadd.s32 %s111, 1
      %p115 = scmp.eq.s32.totalorder %s14, 1
      %p116 = scmp.ne.s32.totalorder %s111, %s113
      %p117 = scmp.eq.s32.totalorder %s14, 0
      %p118 = por %p116, %p117
      %p119 = scmp.ne.s32.totalorder %s111, %s113
      %p120 = scmp.eq.s32.totalorder %s19, 1
      %p121 = por %p119, %p120
      %p122 = scmp.ne.s32.totalorder %s113, %s114
      %p123 = scmp.eq.s32.totalorder %s19, 0
      %p124 = por %p122, %p123
      %p125 = scmp.ne.s32.totalorder %s113, %s114
      %p126 = scmp.eq.s32.totalorder %s20, 1
      %p127 = por %p125, %p126
      %p129 = scmp.ne.s32.totalorder %s114, %s128
      %p130 = scmp.eq.s32.totalorder %s20, 0
      %p131 = por %p129, %p130
      %s132 = ssub.s32 %s14, %s21
      %p133 = scmp.eq.s32.totalorder %s132, 0
      %s135 = sadd.s32 %s134, 1
      %s136 = scalar_select %p133, %s134, %s135
      %p139 = pneg %p133
      %p140 = scmp.eq.s32.totalorder %s14, 1
      %p141 = por %p139, %p140
      %p142 = scmp.ne.s32.totalorder %s134, %s137
      %p143 = scmp.eq.s32.totalorder %s14, 0
      %p144 = por %p142, %p143
      %p145 = scmp.ne.s32.totalorder %s134, %s137
      %p146 = scmp.eq.s32.totalorder %s19, 1
      %p147 = por %p145, %p146
      %p148 = scmp.ne.s32.totalorder %s137, %s138
      %p149 = scmp.eq.s32.totalorder %s19, 0
      %p150 = por %p148, %p149
      %p151 = scmp.ne.s32.totalorder %s137, %s138
      %p152 = scmp.eq.s32.totalorder %s20, 1
      %p153 = por %p151, %p152
      %p155 = scmp.ne.s32.totalorder %s138, %s154
      %p156 = scmp.eq.s32.totalorder %s20, 0
      %p157 = por %p155, %p156
      %p158 = scmp.le.s32.totalorder 1, %s14
      %p159 = scmp.lt.s32.totalorder %s14, 3
      %p160 = pnand %p158, %p159
      %p161 = pneg %p160
      // Predicated region
      $region9: #{bert_forward.9} parent=5 // pred_check
        _
      $region10: #{bert_forward.9} parent=5 // pred_check_branch
        %163 = sbr.rel (%p160) target = $region12
      $region11: #{bert_forward.9} parent=5 // pred_region
        %s164 = ssub.s32 %s14, 1
        // Predicated region
        $region13: #{bert_forward.9} parent=11 // pred_check
          %p165 = pneg %p61
        $region14: #{bert_forward.9} parent=11 // pred_check_branch
          %167 = sbr.rel (%p165) target = $region16
        $region15: #{bert_forward.9} parent=11 // pred_region
          _
        $region16: #{bert_forward.9} parent=11 // pred_fallthru
          _
        // Predicated region
        $region17: #{bert_forward.9} parent=11 // pred_check
          %p168 = pneg %p82
        $region18: #{bert_forward.9} parent=11 // pred_check_branch
          %170 = sbr.rel (%p168) target = $region20
        $region19: #{bert_forward.9} parent=11 // pred_region
          _
        $region20: #{bert_forward.9} parent=11 // pred_fallthru
          _
        // Predicated region
        $region21: #{bert_forward.9} parent=11 // pred_check
          %p171 = pneg %p103
        $region22: #{bert_forward.9} parent=11 // pred_check_branch
          %173 = sbr.rel (%p171) target = $region24
        $region23: #{bert_forward.9} parent=11 // pred_region
          _
        $region24: #{bert_forward.9} parent=11 // pred_fallthru
          _
        // Predicated region
        $region25: #{bert_forward.9} parent=11 // pred_check
          %p174 = pneg %p124
        $region26: #{bert_forward.9} parent=11 // pred_check_branch
          %176 = sbr.rel (%p174) target = $region28
        $region27: #{bert_forward.9} parent=11 // pred_region
          _
        $region28: #{bert_forward.9} parent=11 // pred_fallthru
          _
      $region12: #{bert_forward.9} parent=5 // pred_fallthru
        _
      %p177 = scmp.lt.s32.totalorder %s14, 2
      // Predicated region
      $region29: #{bert_forward.9} parent=5 // pred_check
        %p178 = pneg %p177
      $region30: #{bert_forward.9} parent=5 // pred_check_branch
        %180 = sbr.rel (%p178) target = $region32
      $region31: #{bert_forward.9} parent=5 // pred_region
        // Predicated region
        $region33: #{bert_forward.9} parent=31 // pred_check
          %p181 = pneg %p34
        $region34: #{bert_forward.9} parent=31 // pred_check_branch
          %183 = sbr.rel (%p181) target = $region36
        $region35: #{bert_forward.9} parent=31 // pred_region
          %p184 = scmp.lt.s32.totalorder %s14, 1
          %s185 = scalar_select %p184, %s14, 1
          %s186 = smul.addr %s185, 8
          %s187 = scalar_lea.vmem %s0, %s186
        $region36: #{bert_forward.9} parent=31 // pred_fallthru
          _
      $region32: #{bert_forward.9} parent=5 // pred_fallthru
        _
      %p188 = scmp.le.s32.totalorder 1, %s14
      %p189 = scmp.lt.s32.totalorder %s14, 3
      %p190 = pnand %p188, %p189
      %p191 = pneg %p190
      // Predicated region
      $region37: #{bert_forward.9} parent=5 // pred_check
        _
      $region38: #{bert_forward.9} parent=5 // pred_check_branch
        %193 = sbr.rel (%p190) target = $region40
      $region39: #{bert_forward.9} parent=5 // pred_region
        %s194 = ssub.s32 %s14, 1
        %p195 = scmp.lt.s32.totalorder %s19, 1
        %s196 = scalar_select %p195, %s19, 1
        %s197 = smul.addr %s196, 8
        %s198 = scalar_lea.vmem %s0, %s197
        %p199 = pneg %p40
        %p200 = pneg %p37
        %p201 = pneg %p61
        %p202 = pneg %p58
        %p203 = pneg %p82
        %p204 = pneg %p79
        %p205 = pneg %p103
        %p206 = pneg %p100
        %p207 = pneg %p124
        %p208 = pneg %p121
        %p209 = pneg %p150
        %p210 = pneg %p147
        %s211 = sand.u32 %s137, 1
        %s212 = scalar_lea.sflag [#allocation3], %s211
        %s213 = sand.u32 %s137, 1
        %s214 = smul.addr %s213, 8
        %s215 = scalar_lea.vmem [#allocation2], %s214
        %p216 = scmp.lt.s32.totalorder %s19, 1
        %s217 = scalar_select %p216, %s19, 1
        %s218 = smul.addr %s217, 8
        %s219 = scalar_lea.vmem %s0, %s218
        %v221 = vld [vmem:[%s219] sm:$0xff]
        %v222 = vld [vmem:[%s1] sm:$0x1]
        %v223 = vld [vmem:[%s2] sm:$0x1]
        %vm224 = vcmask 261120
        %v225 = vsel %vm224, %v221, 0.0
        %226 = vadd.xlane.f32.xlu0 %v225
        %v227 = vpop.xlane.xlu0 %226
        %v228 = vrcp.pop 32.0
        %v229 = vmul.f32 %v227, %v228
        %v230 = vsub.f32 %v221, %v229
        %v231 = vmul.f32 %v230, %v230
        %v232 = vsel %vm224, %v231, 0.0
        %233 = vadd.xlane.f32.xlu0 %v232
        %v234 = vpop.xlane.xlu0 %233
        %v235 = vmul.f32 %v234, %v228
        %v236 = vadd.f32 %v235, 1e-05
        %v237 = vrsqrt.pop %v236
        %v238 = vmul.f32 %v230, %v237
        %v240 = vlaneseq
        %v241 = vshrl.u32 %v240, 7
        %v242 = vsub.s32 0, %v241
        %v243 = vrot.slane %v222, %v242
        %v245 = vmul.f32 %v238, %v243
        %v247 = vlaneseq
        %v248 = vshrl.u32 %v247, 7
        %v249 = vsub.s32 0, %v248
        %v250 = vrot.slane %v223, %v249
        %v252 = vadd.f32 %v245, %v250
        %v253 = vpack.c.bf16 %v252, %v252
        %v254 = vld [vmem:[%s3] sm:$0xf]
        %v255 = vld [vmem:[%s3 + $0x4] sm:$0xf]
        %v256 = vld [vmem:[%s3 + $0x8] sm:$0xf]
        %v257 = vld [vmem:[%s3 + $0xc] sm:$0xf]
        %v258 = vld [vmem:[%s4] sm:$0x1]
        %v260 = vlaneseq
        %v261 = vshrl.u32 %v260, 7
        %v262 = vsub.s32 0, %v261
        %v263 = vrot.slane %v258, %v262
        %v269 = vunpack.c.l.b16 %v254
        %v270 = vunpack.c.l.b16 %v255
        %v271 = vunpack.c.l.b16 %v256
        %v272 = vunpack.c.l.b16 %v257
        %v273 = vpack.c.b16 %v270, %v269
        %v274 = vpack.c.b16 %v272, %v271
        %v278 = vsel %vm224, %v253, 0
        %280 = vmatprep.subr.bf16.mxu0 0
        %281 = vmatpush1.bf16.msra.mxu0 %v273
        %282 = vmatprep.subr.bf16.mxu0 0
        %283 = vmatpush1.bf16.msra.mxu0 %v274
        %284 = vmatprep.subr.bf16.mxu0 0
        %285 = vmatpush1.bf16.msra.mxu0 0
        %286 = vmatprep.subr.bf16.mxu0 0
        %287 = vmatpush1.bf16.msra.mxu0 0
        %288 = vmatprep.subr.bf16.mxu0 0
        %289 = vmatpush1.bf16.msra.mxu0 0
        %290 = vmatprep.subr.bf16.mxu0 0
        %291 = vmatpush1.bf16.msra.mxu0 0
        %292 = vmatprep.subr.bf16.mxu0 0
        %293 = vmatpush1.bf16.msra.mxu0 0
        %294 = vmatprep.subr.bf16.mxu0 0
        %295 = vmatpush1.bf16.msra.mxu0 0
        %296 = vmatprep.subr.bf16.mxu0 0
        %297 = vmatpush1.bf16.msra.mxu0 0
        %298 = vmatprep.subr.bf16.mxu0 0
        %299 = vmatpush1.bf16.msra.mxu0 0
        %300 = vmatprep.subr.bf16.mxu0 0
        %301 = vmatpush1.bf16.msra.mxu0 0
        %302 = vmatprep.subr.bf16.mxu0 0
        %303 = vmatpush1.bf16.msra.mxu0 0
        %304 = vmatprep.subr.bf16.mxu0 0
        %305 = vmatpush1.bf16.msra.mxu0 0
        %306 = vmatprep.subr.bf16.mxu0 0
        %307 = vmatpush1.bf16.msra.mxu0 0
        %308 = vmatprep.subr.bf16.mxu0 0
        %309 = vmatpush1.bf16.msra.mxu0 0
        %310 = vmatprep.subr.bf16.mxu0 0
        %311 = vmatpush1.bf16.msra.mxu0 0
        %312 = vmatprep.mubr.bf16.mxu0 0
        %313 = vmatmul.mubr.bf16.gmra.mrb[0].mxu0 %v278
        %v314 = vpop.f32.mrb[0].mxu0
        %v315 = vadd.f32 %v263, %v314
        %v316 = vpop.f32.mrb[0].mxu0
        %v317 = vpop.f32.mrb[0].mxu0
        %v318 = vpop.f32.mrb[0].mxu0
        %319 = vdwg.mxu0
        %vm320 = vcmask 523264
        %321 = vst.msk [vmem:[%s215] sm:$0xff] %vm320, %v315
        %s322 = sand.u32 %s137, 1
        %s323 = scalar_lea.sflag [#allocation3], %s322
        %s324 = sand.u32 %s137, 1
        %s325 = smul.addr %s324, 8
        %s326 = scalar_lea.vmem [#allocation2], %s325
        // Predicated region
        $region41: #{bert_forward.9} parent=39 // pred_check
          %p327 = pneg %p147
        $region42: #{bert_forward.9} parent=39 // pred_check_branch
          %329 = sbr.rel (%p327) target = $region44
        $region43: #{bert_forward.9} parent=39 // pred_region
          %s331 = ssub.s32 128, 128
          %332 = vsyncadd %s323, %s331
          %s333 = smul.addr %s19, 128
          %s334 = scalar_lea.hbm %s5, %s333
          %s336 = sshll.u32 %s326, 4
          %s337 = int_to_ptr.vmem [resolvable:$true] %s336
          %339 = dma.vmem_to_hbm [thread:$0]  %s337, 128, %s334, %s323
        $region44: #{bert_forward.9} parent=39 // pred_fallthru
          _
      $region40: #{bert_forward.9} parent=5 // pred_fallthru
        _
      %p340 = scmp.le.s32.totalorder 2, %s14
      // Predicated region
      $region45: #{bert_forward.9} parent=5 // pred_check
        %p341 = pneg %p340
      $region46: #{bert_forward.9} parent=5 // pred_check_branch
        %343 = sbr.rel (%p341) target = $region48
      $region47: #{bert_forward.9} parent=5 // pred_region
        %s344 = ssub.s32 %s14, 2
        // Predicated region
        $region49: #{bert_forward.9} parent=47 // pred_check
          %p345 = pneg %p153
        $region50: #{bert_forward.9} parent=47 // pred_check_branch
          %347 = sbr.rel (%p345) target = $region52
        $region51: #{bert_forward.9} parent=47 // pred_region
          %s348 = sand.u32 %s138, 1
          %s349 = scalar_lea.sflag [#allocation3], %s348
          %s350 = sand.u32 %s138, 1
          %s351 = smul.addr %s350, 8
          %s352 = scalar_lea.vmem [#allocation2], %s351
          %353 = dma.done %s349, 128
        $region52: #{bert_forward.9} parent=47 // pred_fallthru
          _
      $region48: #{bert_forward.9} parent=5 // pred_fallthru
        _
    $region6: #{bert_forward.9} parent=1 // loop_footer
      %s18 = sadd.s32 1, %s14
    $region7: #{bert_forward.9} parent=1 // loop_footer_branch
      %13 = sbr.rel target = $region3
    $region8: #{bert_forward.9} parent=1 // loop_exit
      _
    %354 = vsyncpa [#allocation3], 1
    %s355 = scalar_lea.sflag [#allocation3], 1
    %356 = vsyncpa %s355, 1

// kernel: bert_forward.6
$region0: #{bert_forward.6}
  #allocation0 [shape = 'u32[]', space=smem, size = 0x4, offset = 0x4, fixed_abs, tag = 'smem constant byte address 0x4 - core index']
  #allocation1 [shape = 'u32[144,128]{1,0:T(1,128)}', space=vmem, size = 0x12000, scoped, tag = 'internal scratch']
  %s0 = inlined_call_operand.vmem [shape: f32[16,32], index: 0, kind: input, shape index: {}]
  %s1 = inlined_call_operand.vmem [shape: f32[1,32], index: 1, kind: input, shape index: {}]
  %s2 = inlined_call_operand.vmem [shape: f32[1,32], index: 2, kind: input, shape index: {}]
  %s3 = inlined_call_operand.vmem [shape: bf16[32,128], index: 3, kind: input, shape index: {}]
  %s4 = inlined_call_operand.vmem [shape: f32[1,128], index: 4, kind: input, shape index: {}]
  %s5 = inlined_call_operand.vmem [shape: bf16[128,32], index: 5, kind: input, shape index: {}]
  %s6 = inlined_call_operand.vmem [shape: f32[1,32], index: 6, kind: input, shape index: {}]
  %s7 = inlined_call_operand.vmem [shape: f32[16,32], index: 7, kind: output, shape index: {}]
  %s8 = sld [smem:[#allocation0]]
  $region61: #{bert_forward.6} parent=0
    _
  %s10 = ssub.s32 1, %s8
  %s11 = scalar_select 0, %s10, %s8
  loop: start=0, step=1, limit=4
  $region2: #{bert_forward.6} parent=0 // loop_pre_header
    _
  $region3: #{bert_forward.6} parent=0 // loop_header
    %s13 = sphi 0, %s17
    %p14 = scmp.ge.s32.totalorder %s13, 4
    %s23 = sphi 0, %s25
    %s26 = sphi 0, %s23
    %s27 = sphi 0, %s26
    %s43 = sphi 0, %s27
    %s47 = sphi 0, %s47
    %s49 = sphi 0, %s47
    %s50 = sphi 0, %s49
    %s64 = sphi 0, %s50
    %s68 = sphi 0, %s68
    %s70 = sphi 0, %s68
    %s71 = sphi 0, %s70
    %s85 = sphi 0, %s71
    %s89 = sphi 0, %s89
    %s91 = sphi 0, %s89
    %s92 = sphi 0, %s91
    %s106 = sphi 0, %s92
    %s110 = sphi 0, %s110
    %s112 = sphi 0, %s110
    %s113 = sphi 0, %s112
    %s127 = sphi 0, %s113
    %s131 = sphi 0, %s131
    %s133 = sphi 0, %s131
    %s134 = sphi 0, %s133
    %s148 = sphi 0, %s134
    %s152 = sphi 0, %s152
    %s154 = sphi 0, %s152
    %s155 = sphi 0, %s154
    %s169 = sphi 0, %s155
    %s175 = sphi 0, %s177
    %s178 = sphi 0, %s175
    %s179 = sphi 0, %s178
    %s195 = sphi 0, %s179
  $region4: #{bert_forward.6} parent=0 // loop_header_branch
    %16 = sbr.rel (%p14) target = $region8
  $region5: #{bert_forward.6} parent=0 // loop_body
    %s18 = ssub.s32 %s13, 1
    %s19 = ssub.s32 %s13, 2
    %s20 = sadd.s32 %s13, 1
    %s21 = ssub.s32 %s13, %s20
    %p22 = scmp.eq.s32.totalorder %s21, 0
    %s24 = sadd.s32 %s23, 1
    %s25 = scalar_select %p22, %s23, %s24
    %p28 = pneg %p22
    %p29 = scmp.eq.s32.totalorder %s13, 1
    %p30 = por %p28, %p29
    %p31 = scmp.ne.s32.totalorder %s23, %s26
    %p32 = scmp.eq.s32.totalorder %s13, 0
    %p33 = por %p31, %p32
    %p34 = scmp.ne.s32.totalorder %s23, %s26
    %p35 = scmp.eq.s32.totalorder %s18, 1
    %p36 = por %p34, %p35
    %p37 = scmp.ne.s32.totalorder %s26, %s27
    %p38 = scmp.eq.s32.totalorder %s18, 0
    %p39 = por %p37, %p38
    %p40 = scmp.ne.s32.totalorder %s26, %s27
    %p41 = scmp.eq.s32.totalorder %s19, 1
    %p42 = por %p40, %p41
    %p44 = scmp.ne.s32.totalorder %s27, %s43
    %p45 = scmp.eq.s32.totalorder %s19, 0
    %p46 = por %p44, %p45
    %s48 = sadd.s32 %s47, 1
    %p51 = scmp.eq.s32.totalorder %s13, 1
    %p52 = scmp.ne.s32.totalorder %s47, %s49
    %p53 = scmp.eq.s32.totalorder %s13, 0
    %p54 = por %p52, %p53
    %p55 = scmp.ne.s32.totalorder %s47, %s49
    %p56 = scmp.eq.s32.totalorder %s18, 1
    %p57 = por %p55, %p56
    %p58 = scmp.ne.s32.totalorder %s49, %s50
    %p59 = scmp.eq.s32.totalorder %s18, 0
    %p60 = por %p58, %p59
    %p61 = scmp.ne.s32.totalorder %s49, %s50
    %p62 = scmp.eq.s32.totalorder %s19, 1
    %p63 = por %p61, %p62
    %p65 = scmp.ne.s32.totalorder %s50, %s64
    %p66 = scmp.eq.s32.totalorder %s19, 0
    %p67 = por %p65, %p66
    %s69 = sadd.s32 %s68, 1
    %p72 = scmp.eq.s32.totalorder %s13, 1
    %p73 = scmp.ne.s32.totalorder %s68, %s70
    %p74 = scmp.eq.s32.totalorder %s13, 0
    %p75 = por %p73, %p74
    %p76 = scmp.ne.s32.totalorder %s68, %s70
    %p77 = scmp.eq.s32.totalorder %s18, 1
    %p78 = por %p76, %p77
    %p79 = scmp.ne.s32.totalorder %s70, %s71
    %p80 = scmp.eq.s32.totalorder %s18, 0
    %p81 = por %p79, %p80
    %p82 = scmp.ne.s32.totalorder %s70, %s71
    %p83 = scmp.eq.s32.totalorder %s19, 1
    %p84 = por %p82, %p83
    %p86 = scmp.ne.s32.totalorder %s71, %s85
    %p87 = scmp.eq.s32.totalorder %s19, 0
    %p88 = por %p86, %p87
    %s90 = sadd.s32 %s89, 1
    %p93 = scmp.eq.s32.totalorder %s13, 1
    %p94 = scmp.ne.s32.totalorder %s89, %s91
    %p95 = scmp.eq.s32.totalorder %s13, 0
    %p96 = por %p94, %p95
    %p97 = scmp.ne.s32.totalorder %s89, %s91
    %p98 = scmp.eq.s32.totalorder %s18, 1
    %p99 = por %p97, %p98
    %p100 = scmp.ne.s32.totalorder %s91, %s92
    %p101 = scmp.eq.s32.totalorder %s18, 0
    %p102 = por %p100, %p101
    %p103 = scmp.ne.s32.totalorder %s91, %s92
    %p104 = scmp.eq.s32.totalorder %s19, 1
    %p105 = por %p103, %p104
    %p107 = scmp.ne.s32.totalorder %s92, %s106
    %p108 = scmp.eq.s32.totalorder %s19, 0
    %p109 = por %p107, %p108
    %s111 = sadd.s32 %s110, 1
    %p114 = scmp.eq.s32.totalorder %s13, 1
    %p115 = scmp.ne.s32.totalorder %s110, %s112
    %p116 = scmp.eq.s32.totalorder %s13, 0
    %p117 = por %p115, %p116
    %p118 = scmp.ne.s32.totalorder %s110, %s112
    %p119 = scmp.eq.s32.totalorder %s18, 1
    %p120 = por %p118, %p119
    %p121 = scmp.ne.s32.totalorder %s112, %s113
    %p122 = scmp.eq.s32.totalorder %s18, 0
    %p123 = por %p121, %p122
    %p124 = scmp.ne.s32.totalorder %s112, %s113
    %p125 = scmp.eq.s32.totalorder %s19, 1
    %p126 = por %p124, %p125
    %p128 = scmp.ne.s32.totalorder %s113, %s127
    %p129 = scmp.eq.s32.totalorder %s19, 0
    %p130 = por %p128, %p129
    %s132 = sadd.s32 %s131, 1
    %p135 = scmp.eq.s32.totalorder %s13, 1
    %p136 = scmp.ne.s32.totalorder %s131, %s133
    %p137 = scmp.eq.s32.totalorder %s13, 0
    %p138 = por %p136, %p137
    %p139 = scmp.ne.s32.totalorder %s131, %s133
    %p140 = scmp.eq.s32.totalorder %s18, 1
    %p141 = por %p139, %p140
    %p142 = scmp.ne.s32.totalorder %s133, %s134
    %p143 = scmp.eq.s32.totalorder %s18, 0
    %p144 = por %p142, %p143
    %p145 = scmp.ne.s32.totalorder %s133, %s134
    %p146 = scmp.eq.s32.totalorder %s19, 1
    %p147 = por %p145, %p146
    %p149 = scmp.ne.s32.totalorder %s134, %s148
    %p150 = scmp.eq.s32.totalorder %s19, 0
    %p151 = por %p149, %p150
    %s153 = sadd.s32 %s152, 1
    %p156 = scmp.eq.s32.totalorder %s13, 1
    %p157 = scmp.ne.s32.totalorder %s152, %s154
    %p158 = scmp.eq.s32.totalorder %s13, 0
    %p159 = por %p157, %p158
    %p160 = scmp.ne.s32.totalorder %s152, %s154
    %p161 = scmp.eq.s32.totalorder %s18, 1
    %p162 = por %p160, %p161
    %p163 = scmp.ne.s32.totalorder %s154, %s155
    %p164 = scmp.eq.s32.totalorder %s18, 0
    %p165 = por %p163, %p164
    %p166 = scmp.ne.s32.totalorder %s154, %s155
    %p167 = scmp.eq.s32.totalorder %s19, 1
    %p168 = por %p166, %p167
    %p170 = scmp.ne.s32.totalorder %s155, %s169
    %p171 = scmp.eq.s32.totalorder %s19, 0
    %p172 = por %p170, %p171
    %s173 = ssub.s32 %s13, %s20
    %p174 = scmp.eq.s32.totalorder %s173, 0
    %s176 = sadd.s32 %s175, 1
    %s177 = scalar_select %p174, %s175, %s176
    %p180 = pneg %p174
    %p181 = scmp.eq.s32.totalorder %s13, 1
    %p182 = por %p180, %p181
    %p183 = scmp.ne.s32.totalorder %s175, %s178
    %p184 = scmp.eq.s32.totalorder %s13, 0
    %p185 = por %p183, %p184
    %p186 = scmp.ne.s32.totalorder %s175, %s178
    %p187 = scmp.eq.s32.totalorder %s18, 1
    %p188 = por %p186, %p187
    %p189 = scmp.ne.s32.totalorder %s178, %s179
    %p190 = scmp.eq.s32.totalorder %s18, 0
    %p191 = por %p189, %p190
    %p192 = scmp.ne.s32.totalorder %s178, %s179
    %p193 = scmp.eq.s32.totalorder %s19, 1
    %p194 = por %p192, %p193
    %p196 = scmp.ne.s32.totalorder %s179, %s195
    %p197 = scmp.eq.s32.totalorder %s19, 0
    %p198 = por %p196, %p197
    %p199 = scmp.le.s32.totalorder 1, %s13
    %p200 = scmp.lt.s32.totalorder %s13, 3
    %p201 = pnand %p199, %p200
    %p202 = pneg %p201
    // Predicated region
    $region9: #{bert_forward.6} parent=5 // pred_check
      _
    $region10: #{bert_forward.6} parent=5 // pred_check_branch
      %204 = sbr.rel (%p201) target = $region12
    $region11: #{bert_forward.6} parent=5 // pred_region
      %s205 = ssub.s32 %s13, 1
      // Predicated region
      $region13: #{bert_forward.6} parent=11 // pred_check
        %p206 = pneg %p60
      $region14: #{bert_forward.6} parent=11 // pred_check_branch
        %208 = sbr.rel (%p206) target = $region16
      $region15: #{bert_forward.6} parent=11 // pred_region
        _
      $region16: #{bert_forward.6} parent=11 // pred_fallthru
        _
      // Predicated region
      $region17: #{bert_forward.6} parent=11 // pred_check
        %p209 = pneg %p81
      $region18: #{bert_forward.6} parent=11 // pred_check_branch
        %211 = sbr.rel (%p209) target = $region20
      $region19: #{bert_forward.6} parent=11 // pred_region
        _
      $region20: #{bert_forward.6} parent=11 // pred_fallthru
        _
      // Predicated region
      $region21: #{bert_forward.6} parent=11 // pred_check
        %p212 = pneg %p102
      $region22: #{bert_forward.6} parent=11 // pred_check_branch
        %214 = sbr.rel (%p212) target = $region24
      $region23: #{bert_forward.6} parent=11 // pred_region
        _
      $region24: #{bert_forward.6} parent=11 // pred_fallthru
        _
      // Predicated region
      $region25: #{bert_forward.6} parent=11 // pred_check
        %p215 = pneg %p123
      $region26: #{bert_forward.6} parent=11 // pred_check_branch
        %217 = sbr.rel (%p215) target = $region28
      $region27: #{bert_forward.6} parent=11 // pred_region
        _
      $region28: #{bert_forward.6} parent=11 // pred_fallthru
        _
      // Predicated region
      $region29: #{bert_forward.6} parent=11 // pred_check
        %p218 = pneg %p144
      $region30: #{bert_forward.6} parent=11 // pred_check_branch
        %220 = sbr.rel (%p218) target = $region32
      $region31: #{bert_forward.6} parent=11 // pred_region
        _
      $region32: #{bert_forward.6} parent=11 // pred_fallthru
        _
      // Predicated region
      $region33: #{bert_forward.6} parent=11 // pred_check
        %p221 = pneg %p165
      $region34: #{bert_forward.6} parent=11 // pred_check_branch
        %223 = sbr.rel (%p221) target = $region36
      $region35: #{bert_forward.6} parent=11 // pred_region
        _
      $region36: #{bert_forward.6} parent=11 // pred_fallthru
        _
    $region12: #{bert_forward.6} parent=5 // pred_fallthru
      _
    %p224 = scmp.lt.s32.totalorder %s13, 2
    // Predicated region
    $region37: #{bert_forward.6} parent=5 // pred_check
      %p225 = pneg %p224
    $region38: #{bert_forward.6} parent=5 // pred_check_branch
      %227 = sbr.rel (%p225) target = $region40
    $region39: #{bert_forward.6} parent=5 // pred_region
      // Predicated region
      $region41: #{bert_forward.6} parent=39 // pred_check
        %p228 = pneg %p33
      $region42: #{bert_forward.6} parent=39 // pred_check_branch
        %230 = sbr.rel (%p228) target = $region44
      $region43: #{bert_forward.6} parent=39 // pred_region
        %p231 = scmp.lt.s32.totalorder %s13, 1
        %s232 = scalar_select %p231, %s13, 1
        %s233 = smul.addr %s232, 8
        %s234 = scalar_lea.vmem %s0, %s233
      $region44: #{bert_forward.6} parent=39 // pred_fallthru
        _
    $region40: #{bert_forward.6} parent=5 // pred_fallthru
      _
    %p235 = scmp.le.s32.totalorder 1, %s13
    %p236 = scmp.lt.s32.totalorder %s13, 3
    %p237 = pnand %p235, %p236
    %p238 = pneg %p237
    // Predicated region
    $region45: #{bert_forward.6} parent=5 // pred_check
      _
    $region46: #{bert_forward.6} parent=5 // pred_check_branch
      %240 = sbr.rel (%p237) target = $region48
    $region47: #{bert_forward.6} parent=5 // pred_region
      %s241 = ssub.s32 %s13, 1
      %p242 = scmp.lt.s32.totalorder %s18, 1
      %s243 = scalar_select %p242, %s18, 1
      %s244 = smul.addr %s243, 8
      %s245 = scalar_lea.vmem %s0, %s244
      %p246 = pneg %p39
      %p247 = pneg %p36
      %p248 = pneg %p60
      %p249 = pneg %p57
      %p250 = pneg %p81
      %p251 = pneg %p78
      %p252 = pneg %p102
      %p253 = pneg %p99
      %p254 = pneg %p123
      %p255 = pneg %p120
      %p256 = pneg %p144
      %p257 = pneg %p141
      %p258 = pneg %p165
      %p259 = pneg %p162
      %p260 = pneg %p191
      %p261 = pneg %p188
      %p262 = scmp.lt.s32.totalorder %s18, 1
      %s263 = scalar_select %p262, %s18, 1
      %s264 = smul.addr %s263, 8
      %s265 = scalar_lea.vmem %s7, %s264
      %p266 = scmp.lt.s32.totalorder %s18, 1
      %s267 = scalar_select %p266, %s18, 1
      %s268 = smul.addr %s267, 8
      %s269 = scalar_lea.vmem %s0, %s268
      %p270 = scmp.lt.s32.totalorder %s18, 1
      %s271 = scalar_select %p270, %s18, 1
      %s272 = smul.addr %s271, 8
      %s273 = scalar_lea.vmem %s7, %s272
      %v275 = vld [vmem:[%s269] sm:$0xff]
      %v276 = vld [vmem:[%s1] sm:$0x1]
      %v277 = vld [vmem:[%s2] sm:$0x1]
      %vm278 = vcmask 261120
      %v279 = vsel %vm278, %v275, 0.0
      %280 = vadd.xlane.f32.xlu0 %v279
      %v281 = vpop.xlane.xlu0 %280
      %v282 = vrcp.pop 32.0
      %v283 = vmul.f32 %v281, %v282
      %v284 = vsub.f32 %v275, %v283
      %v285 = vmul.f32 %v284, %v284
      %v286 = vsel %vm278, %v285, 0.0
      %287 = vadd.xlane.f32.xlu0 %v286
      %v288 = vpop.xlane.xlu0 %287
      %v289 = vmul.f32 %v288, %v282
      %v290 = vadd.f32 %v289, 1e-05
      %v291 = vrsqrt.pop %v290
      %v292 = vmul.f32 %v284, %v291
      %v294 = vlaneseq
      %v295 = vshrl.u32 %v294, 7
      %v296 = vsub.s32 0, %v295
      %v297 = vrot.slane %v276, %v296
      %v299 = vmul.f32 %v292, %v297
      %v301 = vlaneseq
      %v302 = vshrl.u32 %v301, 7
      %v303 = vsub.s32 0, %v302
      %v304 = vrot.slane %v277, %v303
      %v306 = vadd.f32 %v299, %v304
      %v307 = vpack.c.bf16 %v306, %v306
      %v308 = vld [vmem:[%s3] sm:$0xf]
      %v309 = vld [vmem:[%s3 + $0x4] sm:$0xf]
      %v310 = vld [vmem:[%s3 + $0x8] sm:$0xf]
      %v311 = vld [vmem:[%s3 + $0xc] sm:$0xf]
      %v312 = vld [vmem:[%s4] sm:$0x1]
      %v314 = vlaneseq
      %v315 = vshrl.u32 %v314, 7
      %v316 = vsub.s32 0, %v315
      %v317 = vrot.slane %v312, %v316
      %v323 = vunpack.c.l.b16 %v308
      %v324 = vunpack.c.l.b16 %v309
      %v325 = vunpack.c.l.b16 %v310
      %v326 = vunpack.c.l.b16 %v311
      %v327 = vpack.c.b16 %v324, %v323
      %v328 = vpack.c.b16 %v326, %v325
      %v332 = vsel %vm278, %v307, 0
      %334 = vmatprep.subr.bf16.mxu0 0
      %335 = vmatpush1.bf16.msra.mxu0 %v327
      %336 = vmatprep.subr.bf16.mxu0 0
      %337 = vmatpush1.bf16.msra.mxu0 %v328
      %338 = vmatprep.subr.bf16.mxu0 0
      %339 = vmatpush1.bf16.msra.mxu0 0
      %340 = vmatprep.subr.bf16.mxu0 0
      %341 = vmatpush1.bf16.msra.mxu0 0
      %342 = vmatprep.subr.bf16.mxu0 0
      %343 = vmatpush1.bf16.msra.mxu0 0
      %344 = vmatprep.subr.bf16.mxu0 0
      %345 = vmatpush1.bf16.msra.mxu0 0
      %346 = vmatprep.subr.bf16.mxu0 0
      %347 = vmatpush1.bf16.msra.mxu0 0
      %348 = vmatprep.subr.bf16.mxu0 0
      %349 = vmatpush1.bf16.msra.mxu0 0
      %350 = vmatprep.subr.bf16.mxu0 0
      %351 = vmatpush1.bf16.msra.mxu0 0
      %352 = vmatprep.subr.bf16.mxu0 0
      %353 = vmatpush1.bf16.msra.mxu0 0
      %354 = vmatprep.subr.bf16.mxu0 0
      %355 = vmatpush1.bf16.msra.mxu0 0
      %356 = vmatprep.subr.bf16.mxu0 0
      %357 = vmatpush1.bf16.msra.mxu0 0
      %358 = vmatprep.subr.bf16.mxu0 0
      %359 = vmatpush1.bf16.msra.mxu0 0
      %360 = vmatprep.subr.bf16.mxu0 0
      %361 = vmatpush1.bf16.msra.mxu0 0
      %362 = vmatprep.subr.bf16.mxu0 0
      %363 = vmatpush1.bf16.msra.mxu0 0
      %364 = vmatprep.subr.bf16.mxu0 0
      %365 = vmatpush1.bf16.msra.mxu0 0
      %366 = vmatprep.mubr.bf16.mxu0 0
      %367 = vmatmul.mubr.bf16.gmra.mrb[0].mxu0 %v332
      %v368 = vpop.f32.mrb[0].mxu0
      %v369 = vadd.f32 %v317, %v368
      %v370 = vpop.f32.mrb[0].mxu0
      %v371 = vpop.f32.mrb[0].mxu0
      %v372 = vpop.f32.mrb[0].mxu0
      %373 = vdwg.mxu0
      %v374 = vmax.f32 %v369, 0.0
      %v375 = vpack.c.bf16 %v374, %v374
      %v376 = vld [vmem:[%s5] sm:$0xf]
      %v377 = vld [vmem:[%s5 + $0x4] sm:$0xf]
      %v378 = vld [vmem:[%s5 + $0x8] sm:$0xf]
      %v379 = vld [vmem:[%s5 + $0xc] sm:$0xf]
      %v380 = vld [vmem:[%s5 + $0x10] sm:$0xf]
      %v381 = vld [vmem:[%s5 + $0x14] sm:$0xf]
      %v382 = vld [vmem:[%s5 + $0x18] sm:$0xf]
      %v383 = vld [vmem:[%s5 + $0x1c] sm:$0xf]
      %v384 = vld [vmem:[%s5 + $0x20] sm:$0xf]
      %v385 = vld [vmem:[%s5 + $0x24] sm:$0xf]
      %v386 = vld [vmem:[%s5 + $0x28] sm:$0xf]
      %v387 = vld [vmem:[%s5 + $0x2c] sm:$0xf]
      %v388 = vld [vmem:[%s5 + $0x30] sm:$0xf]
      %v389 = vld [vmem:[%s5 + $0x34] sm:$0xf]
      %v390 = vld [vmem:[%s5 + $0x38] sm:$0xf]
      %v391 = vld [vmem:[%s5 + $0x3c] sm:$0xf]
      %v392 = vld [vmem:[%s6] sm:$0x1]
      %v394 = vlaneseq
      %v395 = vshrl.u32 %v394, 7
      %v396 = vsub.s32 0, %v395
      %v397 = vrot.slane %v392, %v396
      %v415 = vunpack.c.l.b16 %v376
      %v416 = vunpack.c.l.b16 %v377
      %v417 = vunpack.c.l.b16 %v378
      %v418 = vunpack.c.l.b16 %v379
      %v419 = vunpack.c.l.b16 %v380
      %v420 = vunpack.c.l.b16 %v381
      %v421 = vunpack.c.l.b16 %v382
      %v422 = vunpack.c.l.b16 %v383
      %v423 = vunpack.c.l.b16 %v384
      %v424 = vunpack.c.l.b16 %v385
      %v425 = vunpack.c.l.b16 %v386
      %v426 = vunpack.c.l.b16 %v387
      %v427 = vunpack.c.l.b16 %v388
      %v428 = vunpack.c.l.b16 %v389
      %v429 = vunpack.c.l.b16 %v390
      %v430 = vunpack.c.l.b16 %v391
      %v431 = vpack.c.b16 %v416, %v415
      %v432 = vpack.c.b16 %v418, %v417
      %v433 = vpack.c.b16 %v420, %v419
      %v434 = vpack.c.b16 %v422, %v421
      %v435 = vpack.c.b16 %v424, %v423
      %v436 = vpack.c.b16 %v426, %v425
      %v437 = vpack.c.b16 %v428, %v427
      %v438 = vpack.c.b16 %v430, %v429
      %447 = vmatprep.subr.bf16.mxu0 0
      %448 = vmatpush1.bf16.msra.mxu0 %v431
      %449 = vmatprep.subr.bf16.mxu0 0
      %450 = vmatpush1.bf16.msra.mxu0 %v432
      %451 = vmatprep.subr.bf16.mxu0 0
      %452 = vmatpush1.bf16.msra.mxu0 %v433
      %453 = vmatprep.subr.bf16.mxu0 0
      %454 = vmatpush1.bf16.msra.mxu0 %v434
      %455 = vmatprep.subr.bf16.mxu0 0
      %456 = vmatpush1.bf16.msra.mxu0 %v435
      %457 = vmatprep.subr.bf16.mxu0 0
      %458 = vmatpush1.bf16.msra.mxu0 %v436
      %459 = vmatprep.subr.bf16.mxu0 0
      %460 = vmatpush1.bf16.msra.mxu0 %v437
      %461 = vmatprep.subr.bf16.mxu0 0
      %462 = vmatpush1.bf16.msra.mxu0 %v438
      %463 = vmatprep.subr.bf16.mxu0 0
      %464 = vmatpush1.bf16.msra.mxu0 0
      %465 = vmatprep.subr.bf16.mxu0 0
      %466 = vmatpush1.bf16.msra.mxu0 0
      %467 = vmatprep.subr.bf16.mxu0 0
      %468 = vmatpush1.bf16.msra.mxu0 0
      %469 = vmatprep.subr.bf16.mxu0 0
      %470 = vmatpush1.bf16.msra.mxu0 0
      %471 = vmatprep.subr.bf16.mxu0 0
      %472 = vmatpush1.bf16.msra.mxu0 0
      %473 = vmatprep.subr.bf16.mxu0 0
      %474 = vmatpush1.bf16.msra.mxu0 0
      %475 = vmatprep.subr.bf16.mxu0 0
      %476 = vmatpush1.bf16.msra.mxu0 0
      %477 = vmatprep.subr.bf16.mxu0 0
      %478 = vmatpush1.bf16.msra.mxu0 0
      %479 = vmatprep.mubr.bf16.mxu0 0
      %480 = vmatmul.mubr.bf16.gmra.mrb[0].mxu0 %v375
      %v481 = vpop.f32.mrb[0].mxu0
      %v482 = vadd.f32 %v397, %v481
      %v483 = vpop.f32.mrb[0].mxu0
      %v484 = vpop.f32.mrb[0].mxu0
      %v485 = vpop.f32.mrb[0].mxu0
      %486 = vdwg.mxu0
      %v487 = vadd.f32 %v275, %v482
      %488 = vst.msk [vmem:[%s273] sm:$0xff] %vm278, %v487
      %p489 = scmp.lt.s32.totalorder %s18, 1
      %s490 = scalar_select %p489, %s18, 1
      %s491 = smul.addr %s490, 8
      %s492 = scalar_lea.vmem %s7, %s491
      // Predicated region
      $region49: #{bert_forward.6} parent=47 // pred_check
        %p493 = pneg %p188
      $region50: #{bert_forward.6} parent=47 // pred_check_branch
        %495 = sbr.rel (%p493) target = $region52
      $region51: #{bert_forward.6} parent=47 // pred_region
        _
      $region52: #{bert_forward.6} parent=47 // pred_fallthru
        _
    $region48: #{bert_forward.6} parent=5 // pred_fallthru
      _
    %p496 = scmp.le.s32.totalorder 2, %s13
    // Predicated region
    $region53: #{bert_forward.6} parent=5 // pred_check
      %p497 = pneg %p496
    $region54: #{bert_forward.6} parent=5 // pred_check_branch
      %499 = sbr.rel (%p497) target = $region56
    $region55: #{bert_forward.6} parent=5 // pred_region
      %s500 = ssub.s32 %s13, 2
      // Predicated region
      $region57: #{bert_forward.6} parent=55 // pred_check
        %p501 = pneg %p194
      $region58: #{bert_forward.6} parent=55 // pred_check_branch
        %503 = sbr.rel (%p501) target = $region60
      $region59: #{bert_forward.6} parent=55 // pred_region
        %p504 = scmp.lt.s32.totalorder %s19, 1
        %s505 = scalar_select %p504, %s19, 1
        %s506 = smul.addr %s505, 8
        %s507 = scalar_lea.vmem %s7, %s506
      $region60: #{bert_forward.6} parent=55 // pred_fallthru
        _
    $region56: #{bert_forward.6} parent=5 // pred_fallthru
      _
  $region6: #{bert_forward.6} parent=0 // loop_footer
    %s17 = sadd.s32 1, %s13
  $region7: #{bert_forward.6} parent=0 // loop_footer_branch
    %12 = sbr.rel target = $region3
  $region8: #{bert_forward.6} parent=0 // loop_exit
    _

// kernel: bert_forward.5
$region0: #{bert_forward.5}
  #allocation0 [shape = 'u32[]', space=smem, size = 0x4, offset = 0x4, fixed_abs, tag = 'smem constant byte address 0x4 - core index']
  #allocation1 [shape = 'u32[144,128]{1,0:T(1,128)}', space=vmem, size = 0x12000, scoped, tag = 'internal scratch']
  %s0 = inlined_call_operand.vmem [shape: f32[2,8,32], index: 0, kind: input, shape index: {}]
  %s1 = inlined_call_operand.vmem [shape: f32[1,32], index: 1, kind: input, shape index: {}]
  %s2 = inlined_call_operand.vmem [shape: f32[1,32], index: 2, kind: input, shape index: {}]
  %s3 = inlined_call_operand.vmem [shape: bf16[32,96], index: 3, kind: input, shape index: {}]
  %s4 = inlined_call_operand.vmem [shape: bf16[32,32], index: 4, kind: input, shape index: {}]
  %s5 = inlined_call_operand.vmem [shape: f32[1,32], index: 5, kind: input, shape index: {}]
  %s6 = inlined_call_operand.vmem [shape: f32[2,8,32], index: 6, kind: output, shape index: {}]
  %s7 = sld [smem:[#allocation0]]
  $region57: #{bert_forward.5} parent=0
    _
  %s9 = ssub.s32 1, %s7
  %s10 = scalar_select 0, %s9, %s7
  loop: start=0, step=1, limit=4
  $region2: #{bert_forward.5} parent=0 // loop_pre_header
    _
  $region3: #{bert_forward.5} parent=0 // loop_header
    %s12 = sphi 0, %s16
    %p13 = scmp.ge.s32.totalorder %s12, 4
    %s22 = sphi 0, %s24
    %s25 = sphi 0, %s22
    %s26 = sphi 0, %s25
    %s42 = sphi 0, %s26
    %s46 = sphi 0, %s46
    %s48 = sphi 0, %s46
    %s49 = sphi 0, %s48
    %s63 = sphi 0, %s49
    %s67 = sphi 0, %s67
    %s69 = sphi 0, %s67
    %s70 = sphi 0, %s69
    %s84 = sphi 0, %s70
    %s88 = sphi 0, %s88
    %s90 = sphi 0, %s88
    %s91 = sphi 0, %s90
    %s105 = sphi 0, %s91
    %s109 = sphi 0, %s109
    %s111 = sphi 0, %s109
    %s112 = sphi 0, %s111
    %s126 = sphi 0, %s112
    %s130 = sphi 0, %s130
    %s132 = sphi 0, %s130
    %s133 = sphi 0, %s132
    %s147 = sphi 0, %s133
    %s153 = sphi 0, %s155
    %s156 = sphi 0, %s153
    %s157 = sphi 0, %s156
    %s173 = sphi 0, %s157
  $region4: #{bert_forward.5} parent=0 // loop_header_branch
    %15 = sbr.rel (%p13) target = $region8
  $region5: #{bert_forward.5} parent=0 // loop_body
    %s17 = ssub.s32 %s12, 1
    %s18 = ssub.s32 %s12, 2
    %s19 = sadd.s32 %s12, 1
    %s20 = ssub.s32 %s12, %s19
    %p21 = scmp.eq.s32.totalorder %s20, 0
    %s23 = sadd.s32 %s22, 1
    %s24 = scalar_select %p21, %s22, %s23
    %p27 = pneg %p21
    %p28 = scmp.eq.s32.totalorder %s12, 1
    %p29 = por %p27, %p28
    %p30 = scmp.ne.s32.totalorder %s22, %s25
    %p31 = scmp.eq.s32.totalorder %s12, 0
    %p32 = por %p30, %p31
    %p33 = scmp.ne.s32.totalorder %s22, %s25
    %p34 = scmp.eq.s32.totalorder %s17, 1
    %p35 = por %p33, %p34
    %p36 = scmp.ne.s32.totalorder %s25, %s26
    %p37 = scmp.eq.s32.totalorder %s17, 0
    %p38 = por %p36, %p37
    %p39 = scmp.ne.s32.totalorder %s25, %s26
    %p40 = scmp.eq.s32.totalorder %s18, 1
    %p41 = por %p39, %p40
    %p43 = scmp.ne.s32.totalorder %s26, %s42
    %p44 = scmp.eq.s32.totalorder %s18, 0
    %p45 = por %p43, %p44
    %s47 = sadd.s32 %s46, 1
    %p50 = scmp.eq.s32.totalorder %s12, 1
    %p51 = scmp.ne.s32.totalorder %s46, %s48
    %p52 = scmp.eq.s32.totalorder %s12, 0
    %p53 = por %p51, %p52
    %p54 = scmp.ne.s32.totalorder %s46, %s48
    %p55 = scmp.eq.s32.totalorder %s17, 1
    %p56 = por %p54, %p55
    %p57 = scmp.ne.s32.totalorder %s48, %s49
    %p58 = scmp.eq.s32.totalorder %s17, 0
    %p59 = por %p57, %p58
    %p60 = scmp.ne.s32.totalorder %s48, %s49
    %p61 = scmp.eq.s32.totalorder %s18, 1
    %p62 = por %p60, %p61
    %p64 = scmp.ne.s32.totalorder %s49, %s63
    %p65 = scmp.eq.s32.totalorder %s18, 0
    %p66 = por %p64, %p65
    %s68 = sadd.s32 %s67, 1
    %p71 = scmp.eq.s32.totalorder %s12, 1
    %p72 = scmp.ne.s32.totalorder %s67, %s69
    %p73 = scmp.eq.s32.totalorder %s12, 0
    %p74 = por %p72, %p73
    %p75 = scmp.ne.s32.totalorder %s67, %s69
    %p76 = scmp.eq.s32.totalorder %s17, 1
    %p77 = por %p75, %p76
    %p78 = scmp.ne.s32.totalorder %s69, %s70
    %p79 = scmp.eq.s32.totalorder %s17, 0
    %p80 = por %p78, %p79
    %p81 = scmp.ne.s32.totalorder %s69, %s70
    %p82 = scmp.eq.s32.totalorder %s18, 1
    %p83 = por %p81, %p82
    %p85 = scmp.ne.s32.totalorder %s70, %s84
    %p86 = scmp.eq.s32.totalorder %s18, 0
    %p87 = por %p85, %p86
    %s89 = sadd.s32 %s88, 1
    %p92 = scmp.eq.s32.totalorder %s12, 1
    %p93 = scmp.ne.s32.totalorder %s88, %s90
    %p94 = scmp.eq.s32.totalorder %s12, 0
    %p95 = por %p93, %p94
    %p96 = scmp.ne.s32.totalorder %s88, %s90
    %p97 = scmp.eq.s32.totalorder %s17, 1
    %p98 = por %p96, %p97
    %p99 = scmp.ne.s32.totalorder %s90, %s91
    %p100 = scmp.eq.s32.totalorder %s17, 0
    %p101 = por %p99, %p100
    %p102 = scmp.ne.s32.totalorder %s90, %s91
    %p103 = scmp.eq.s32.totalorder %s18, 1
    %p104 = por %p102, %p103
    %p106 = scmp.ne.s32.totalorder %s91, %s105
    %p107 = scmp.eq.s32.totalorder %s18, 0
    %p108 = por %p106, %p107
    %s110 = sadd.s32 %s109, 1
    %p113 = scmp.eq.s32.totalorder %s12, 1
    %p114 = scmp.ne.s32.totalorder %s109, %s111
    %p115 = scmp.eq.s32.totalorder %s12, 0
    %p116 = por %p114, %p115
    %p117 = scmp.ne.s32.totalorder %s109, %s111
    %p118 = scmp.eq.s32.totalorder %s17, 1
    %p119 = por %p117, %p118
    %p120 = scmp.ne.s32.totalorder %s111, %s112
    %p121 = scmp.eq.s32.totalorder %s17, 0
    %p122 = por %p120, %p121
    %p123 = scmp.ne.s32.totalorder %s111, %s112
    %p124 = scmp.eq.s32.totalorder %s18, 1
    %p125 = por %p123, %p124
    %p127 = scmp.ne.s32.totalorder %s112, %s126
    %p128 = scmp.eq.s32.totalorder %s18, 0
    %p129 = por %p127, %p128
    %s131 = sadd.s32 %s130, 1
    %p134 = scmp.eq.s32.totalorder %s12, 1
    %p135 = scmp.ne.s32.totalorder %s130, %s132
    %p136 = scmp.eq.s32.totalorder %s12, 0
    %p137 = por %p135, %p136
    %p138 = scmp.ne.s32.totalorder %s130, %s132
    %p139 = scmp.eq.s32.totalorder %s17, 1
    %p140 = por %p138, %p139
    %p141 = scmp.ne.s32.totalorder %s132, %s133
    %p142 = scmp.eq.s32.totalorder %s17, 0
    %p143 = por %p141, %p142
    %p144 = scmp.ne.s32.totalorder %s132, %s133
    %p145 = scmp.eq.s32.totalorder %s18, 1
    %p146 = por %p144, %p145
    %p148 = scmp.ne.s32.totalorder %s133, %s147
    %p149 = scmp.eq.s32.totalorder %s18, 0
    %p150 = por %p148, %p149
    %s151 = ssub.s32 %s12, %s19
    %p152 = scmp.eq.s32.totalorder %s151, 0
    %s154 = sadd.s32 %s153, 1
    %s155 = scalar_select %p152, %s153, %s154
    %p158 = pneg %p152
    %p159 = scmp.eq.s32.totalorder %s12, 1
    %p160 = por %p158, %p159
    %p161 = scmp.ne.s32.totalorder %s153, %s156
    %p162 = scmp.eq.s32.totalorder %s12, 0
    %p163 = por %p161, %p162
    %p164 = scmp.ne.s32.totalorder %s153, %s156
    %p165 = scmp.eq.s32.totalorder %s17, 1
    %p166 = por %p164, %p165
    %p167 = scmp.ne.s32.totalorder %s156, %s157
    %p168 = scmp.eq.s32.totalorder %s17, 0
    %p169 = por %p167, %p168
    %p170 = scmp.ne.s32.totalorder %s156, %s157
    %p171 = scmp.eq.s32.totalorder %s18, 1
    %p172 = por %p170, %p171
    %p174 = scmp.ne.s32.totalorder %s157, %s173
    %p175 = scmp.eq.s32.totalorder %s18, 0
    %p176 = por %p174, %p175
    %p177 = scmp.le.s32.totalorder 1, %s12
    %p178 = scmp.lt.s32.totalorder %s12, 3
    %p179 = pnand %p177, %p178
    %p180 = pneg %p179
    // Predicated region
    $region9: #{bert_forward.5} parent=5 // pred_check
      _
    $region10: #{bert_forward.5} parent=5 // pred_check_branch
      %182 = sbr.rel (%p179) target = $region12
    $region11: #{bert_forward.5} parent=5 // pred_region
      %s183 = ssub.s32 %s12, 1
      // Predicated region
      $region13: #{bert_forward.5} parent=11 // pred_check
        %p184 = pneg %p59
      $region14: #{bert_forward.5} parent=11 // pred_check_branch
        %186 = sbr.rel (%p184) target = $region16
      $region15: #{bert_forward.5} parent=11 // pred_region
        _
      $region16: #{bert_forward.5} parent=11 // pred_fallthru
        _
      // Predicated region
      $region17: #{bert_forward.5} parent=11 // pred_check
        %p187 = pneg %p80
      $region18: #{bert_forward.5} parent=11 // pred_check_branch
        %189 = sbr.rel (%p187) target = $region20
      $region19: #{bert_forward.5} parent=11 // pred_region
        _
      $region20: #{bert_forward.5} parent=11 // pred_fallthru
        _
      // Predicated region
      $region21: #{bert_forward.5} parent=11 // pred_check
        %p190 = pneg %p101
      $region22: #{bert_forward.5} parent=11 // pred_check_branch
        %192 = sbr.rel (%p190) target = $region24
      $region23: #{bert_forward.5} parent=11 // pred_region
        _
      $region24: #{bert_forward.5} parent=11 // pred_fallthru
        _
      // Predicated region
      $region25: #{bert_forward.5} parent=11 // pred_check
        %p193 = pneg %p122
      $region26: #{bert_forward.5} parent=11 // pred_check_branch
        %195 = sbr.rel (%p193) target = $region28
      $region27: #{bert_forward.5} parent=11 // pred_region
        _
      $region28: #{bert_forward.5} parent=11 // pred_fallthru
        _
      // Predicated region
      $region29: #{bert_forward.5} parent=11 // pred_check
        %p196 = pneg %p143
      $region30: #{bert_forward.5} parent=11 // pred_check_branch
        %198 = sbr.rel (%p196) target = $region32
      $region31: #{bert_forward.5} parent=11 // pred_region
        _
      $region32: #{bert_forward.5} parent=11 // pred_fallthru
        _
    $region12: #{bert_forward.5} parent=5 // pred_fallthru
      _
    %p199 = scmp.lt.s32.totalorder %s12, 2
    // Predicated region
    $region33: #{bert_forward.5} parent=5 // pred_check
      %p200 = pneg %p199
    $region34: #{bert_forward.5} parent=5 // pred_check_branch
      %202 = sbr.rel (%p200) target = $region36
    $region35: #{bert_forward.5} parent=5 // pred_region
      // Predicated region
      $region37: #{bert_forward.5} parent=35 // pred_check
        %p203 = pneg %p32
      $region38: #{bert_forward.5} parent=35 // pred_check_branch
        %205 = sbr.rel (%p203) target = $region40
      $region39: #{bert_forward.5} parent=35 // pred_region
        %p206 = scmp.lt.s32.totalorder %s12, 1
        %s207 = scalar_select %p206, %s12, 1
        %s208 = smul.addr %s207, 8
        %s209 = scalar_lea.vmem %s0, %s208
      $region40: #{bert_forward.5} parent=35 // pred_fallthru
        _
    $region36: #{bert_forward.5} parent=5 // pred_fallthru
      _
    %p210 = scmp.le.s32.totalorder 1, %s12
    %p211 = scmp.lt.s32.totalorder %s12, 3
    %p212 = pnand %p210, %p211
    %p213 = pneg %p212
    // Predicated region
    $region41: #{bert_forward.5} parent=5 // pred_check
      _
    $region42: #{bert_forward.5} parent=5 // pred_check_branch
      %215 = sbr.rel (%p212) target = $region44
    $region43: #{bert_forward.5} parent=5 // pred_region
      %s216 = ssub.s32 %s12, 1
      %p217 = scmp.lt.s32.totalorder %s17, 1
      %s218 = scalar_select %p217, %s17, 1
      %s219 = smul.addr %s218, 8
      %s220 = scalar_lea.vmem %s0, %s219
      %p221 = pneg %p38
      %p222 = pneg %p35
      %p223 = pneg %p59
      %p224 = pneg %p56
      %p225 = pneg %p80
      %p226 = pneg %p77
      %p227 = pneg %p101
      %p228 = pneg %p98
      %p229 = pneg %p122
      %p230 = pneg %p119
      %p231 = pneg %p143
      %p232 = pneg %p140
      %p233 = pneg %p169
      %p234 = pneg %p166
      %p235 = scmp.lt.s32.totalorder %s17, 1
      %s236 = scalar_select %p235, %s17, 1
      %s237 = smul.addr %s236, 8
      %s238 = scalar_lea.vmem %s6, %s237
      %p239 = scmp.lt.s32.totalorder %s17, 1
      %s240 = scalar_select %p239, %s17, 1
      %s241 = smul.addr %s240, 8
      %s242 = scalar_lea.vmem %s0, %s241
      %p243 = scmp.lt.s32.totalorder %s17, 1
      %s244 = scalar_select %p243, %s17, 1
      %s245 = smul.addr %s244, 8
      %s246 = scalar_lea.vmem %s6, %s245
      %v248 = vld [vmem:[%s242] sm:$0xff]
      %v249 = vld [vmem:[%s1] sm:$0x1]
      %v250 = vld [vmem:[%s2] sm:$0x1]
      %vm251 = vcmask 261120
      %v252 = vsel %vm251, %v248, 0.0
      %253 = vadd.xlane.f32.xlu0 %v252
      %v254 = vpop.xlane.xlu0 %253
      %v255 = vrcp.pop 32.0
      %v256 = vmul.f32 %v254, %v255
      %v257 = vsub.f32 %v248, %v256
      %v258 = vmul.f32 %v257, %v257
      %v259 = vsel %vm251, %v258, 0.0
      %260 = vadd.xlane.f32.xlu0 %v259
      %v261 = vpop.xlane.xlu0 %260
      %v262 = vmul.f32 %v261, %v255
      %v263 = vadd.f32 %v262, 1e-05
      %v264 = vrsqrt.pop %v263
      %v265 = vmul.f32 %v257, %v264
      %v267 = vlaneseq
      %v268 = vshrl.u32 %v267, 7
      %v269 = vsub.s32 0, %v268
      %v270 = vrot.slane %v249, %v269
      %v272 = vmul.f32 %v265, %v270
      %v274 = vlaneseq
      %v275 = vshrl.u32 %v274, 7
      %v276 = vsub.s32 0, %v275
      %v277 = vrot.slane %v250, %v276
      %v279 = vadd.f32 %v272, %v277
      %v280 = vpack.c.bf16 %v279, %v279
      %v281 = vld [vmem:[%s3] sm:$0xf]
      %v282 = vld [vmem:[%s3 + $0x4] sm:$0xf]
      %v283 = vld [vmem:[%s3 + $0x8] sm:$0xf]
      %v284 = vld [vmem:[%s3 + $0xc] sm:$0xf]
      %v289 = vunpack.c.l.b16 %v281
      %v290 = vunpack.c.l.b16 %v282
      %v291 = vunpack.c.l.b16 %v283
      %v292 = vunpack.c.l.b16 %v284
      %v293 = vpack.c.b16 %v290, %v289
      %v294 = vpack.c.b16 %v292, %v291
      %v298 = vsel %vm251, %v280, 0
      %300 = vmatprep.subr.bf16.mxu0 0
      %301 = vmatpush1.bf16.msra.mxu0 %v293
      %302 = vmatprep.subr.bf16.mxu0 0
      %303 = vmatpush1.bf16.msra.mxu0 %v294
      %304 = vmatprep.subr.bf16.mxu0 0
      %305 = vmatpush1.bf16.msra.mxu0 0
      %306 = vmatprep.subr.bf16.mxu0 0
      %307 = vmatpush1.bf16.msra.mxu0 0
      %308 = vmatprep.subr.bf16.mxu0 0
      %309 = vmatpush1.bf16.msra.mxu0 0
      %310 = vmatprep.subr.bf16.mxu0 0
      %311 = vmatpush1.bf16.msra.mxu0 0
      %312 = vmatprep.subr.bf16.mxu0 0
      %313 = vmatpush1.bf16.msra.mxu0 0
      %314 = vmatprep.subr.bf16.mxu0 0
      %315 = vmatpush1.bf16.msra.mxu0 0
      %316 = vmatprep.subr.bf16.mxu0 0
      %317 = vmatpush1.bf16.msra.mxu0 0
      %318 = vmatprep.subr.bf16.mxu0 0
      %319 = vmatpush1.bf16.msra.mxu0 0
      %320 = vmatprep.subr.bf16.mxu0 0
      %321 = vmatpush1.bf16.msra.mxu0 0
      %322 = vmatprep.subr.bf16.mxu0 0
      %323 = vmatpush1.bf16.msra.mxu0 0
      %324 = vmatprep.subr.bf16.mxu0 0
      %325 = vmatpush1.bf16.msra.mxu0 0
      %326 = vmatprep.subr.bf16.mxu0 0
      %327 = vmatpush1.bf16.msra.mxu0 0
      %328 = vmatprep.subr.bf16.mxu0 0
      %329 = vmatpush1.bf16.msra.mxu0 0
      %330 = vmatprep.subr.bf16.mxu0 0
      %331 = vmatpush1.bf16.msra.mxu0 0
      %332 = vmatprep.mubr.bf16.mxu0 0
      %333 = vmatmul.mubr.bf16.gmra.mrb[0].mxu0 %v298
      %v334 = vpop.f32.mrb[0].mxu0
      %v335 = vadd.f32 0.0, %v334
      %v336 = vpop.f32.mrb[0].mxu0
      %v337 = vpop.f32.mrb[0].mxu0
      %v338 = vpop.f32.mrb[0].mxu0
      %339 = vdwg.mxu0
      %v340 = vpack.c.bf16 %v335, %v335
      %342 = vrot.lane.b32.xlu0 %v340, 96
      %v343 = vpop.permute.xlu0 %342
      %vm344 = vcmask 64512
      %v346 = vsel %vm344, %v340, 0
      %v349 = vsel %vm344, %v343, 0
      %351 = vmatprep.subr.bf16.mxu0 0
      %352 = vmatpush1.bf16.xpose.msra.mxu0 %v349
      %353 = vmatprep.subr.bf16.mxu0 0
      %354 = vmatpush1.bf16.xpose.msra.mxu0 0
      %355 = vmatprep.subr.bf16.mxu0 0
      %356 = vmatpush1.bf16.xpose.msra.mxu0 0
      %357 = vmatprep.subr.bf16.mxu0 0
      %358 = vmatpush1.bf16.xpose.msra.mxu0 0
      %359 = vmatprep.subr.bf16.mxu0 0
      %360 = vmatpush1.bf16.xpose.msra.mxu0 0
      %361 = vmatprep.subr.bf16.mxu0 0
      %362 = vmatpush1.bf16.xpose.msra.mxu0 0
      %363 = vmatprep.subr.bf16.mxu0 0
      %364 = vmatpush1.bf16.xpose.msra.mxu0 0
      %365 = vmatprep.subr.bf16.mxu0 0
      %366 = vmatpush1.bf16.xpose.msra.mxu0 0
      %367 = vmatprep.subr.bf16.mxu0 0
      %368 = vmatpush1.bf16.xpose.msra.mxu0 0
      %369 = vmatprep.subr.bf16.mxu0 0
      %370 = vmatpush1.bf16.xpose.msra.mxu0 0
      %371 = vmatprep.subr.bf16.mxu0 0
      %372 = vmatpush1.bf16.xpose.msra.mxu0 0
      %373 = vmatprep.subr.bf16.mxu0 0
      %374 = vmatpush1.bf16.xpose.msra.mxu0 0
      %375 = vmatprep.subr.bf16.mxu0 0
      %376 = vmatpush1.bf16.xpose.msra.mxu0 0
      %377 = vmatprep.subr.bf16.mxu0 0
      %378 = vmatpush1.bf16.xpose.msra.mxu0 0
      %379 = vmatprep.subr.bf16.mxu0 0
      %380 = vmatpush1.bf16.xpose.msra.mxu0 0
      %381 = vmatprep.subr.bf16.mxu0 0
      %382 = vmatpush1.bf16.xpose.msra.mxu0 0
      %383 = vmatprep.mubr.bf16.mxu0 0
      %384 = vmatmul.mubr.bf16.gmra.mrb[0].mxu0 %v346
      %v385 = vpop.f32.mrb[0].mxu0
      %v386 = vadd.f32 0.0, %v385
      %v387 = vpop.f32.mrb[0].mxu0
      %v388 = vpop.f32.mrb[0].mxu0
      %v389 = vpop.f32.mrb[0].mxu0
      %390 = vdwg.mxu0
      %v391 = vmul.f32 %v386, 0.17677669
      %v392 = vsel %vm344, %v391, -inf
      %393 = vmax.xlane.f32.xlu0 %v392
      %v394 = vpop.xlane.xlu0 %393
      %v395 = vsub.f32 %v391, %v394
      %v396 = vmul.f32 %v395, 1.442695
      %v397 = vpow.pop %v396
      %v398 = vsel %vm344, %v397, 0.0
      %399 = vadd.xlane.f32.xlu0 %v398
      %v400 = vpop.xlane.xlu0 %399
      %v401 = vrcp.pop %v400
      %v402 = vmul.f32 %v397, %v401
      %v403 = vpack.c.bf16 %v402, %v402
      %404 = vrot.lane.b32.xlu0 %v340, 64
      %v405 = vpop.permute.xlu0 %404
      %v407 = vsel %vm344, %v403, 0
      %vm409 = vcmask 1043456
      %v411 = vsel %vm409, %v405, 0
      %413 = vmatprep.subr.bf16.mxu0 0
      %414 = vmatpush1.bf16.msra.mxu0 %v411
      %415 = vmatprep.subr.bf16.mxu0 0
      %416 = vmatpush1.bf16.msra.mxu0 0
      %417 = vmatprep.subr.bf16.mxu0 0
      %418 = vmatpush1.bf16.msra.mxu0 0
      %419 = vmatprep.subr.bf16.mxu0 0
      %420 = vmatpush1.bf16.msra.mxu0 0
      %421 = vmatprep.subr.bf16.mxu0 0
      %422 = vmatpush1.bf16.msra.mxu0 0
      %423 = vmatprep.subr.bf16.mxu0 0
      %424 = vmatpush1.bf16.msra.mxu0 0
      %425 = vmatprep.subr.bf16.mxu0 0
      %426 = vmatpush1.bf16.msra.mxu0 0
      %427 = vmatprep.subr.bf16.mxu0 0
      %428 = vmatpush1.bf16.msra.mxu0 0
      %429 = vmatprep.subr.bf16.mxu0 0
      %430 = vmatpush1.bf16.msra.mxu0 0
      %431 = vmatprep.subr.bf16.mxu0 0
      %432 = vmatpush1.bf16.msra.mxu0 0
      %433 = vmatprep.subr.bf16.mxu0 0
      %434 = vmatpush1.bf16.msra.mxu0 0
      %435 = vmatprep.subr.bf16.mxu0 0
      %436 = vmatpush1.bf16.msra.mxu0 0
      %437 = vmatprep.subr.bf16.mxu0 0
      %438 = vmatpush1.bf16.msra.mxu0 0
      %439 = vmatprep.subr.bf16.mxu0 0
      %440 = vmatpush1.bf16.msra.mxu0 0
      %441 = vmatprep.subr.bf16.mxu0 0
      %442 = vmatpush1.bf16.msra.mxu0 0
      %443 = vmatprep.subr.bf16.mxu0 0
      %444 = vmatpush1.bf16.msra.mxu0 0
      %445 = vmatprep.mubr.bf16.mxu0 0
      %446 = vmatmul.mubr.bf16.gmra.mrb[0].mxu0 %v407
      %v447 = vpop.f32.mrb[0].mxu0
      %v448 = vadd.f32 0.0, %v447
      %v449 = vpop.f32.mrb[0].mxu0
      %v450 = vpop.f32.mrb[0].mxu0
      %v451 = vpop.f32.mrb[0].mxu0
      %452 = vdwg.mxu0
      %v453 = vpack.c.bf16 %v448, %v448
      %v454 = vld [vmem:[%s4] sm:$0xf]
      %455 = vrot.lane.b32.xlu0 %v340, 120
      %v456 = vpop.permute.xlu0 %455
      %457 = vrot.lane.b32.xlu0 %v340, 88
      %v458 = vpop.permute.xlu0 %457
      %v460 = vsel %vm344, %v456, 0
      %v463 = vsel %vm344, %v458, 0
      %465 = vmatprep.subr.bf16.mxu0 0
      %466 = vmatpush1.bf16.xpose.msra.mxu0 %v463
      %467 = vmatprep.subr.bf16.mxu0 0
      %468 = vmatpush1.bf16.xpose.msra.mxu0 0
      %469 = vmatprep.subr.bf16.mxu0 0
      %470 = vmatpush1.bf16.xpose.msra.mxu0 0
      %471 = vmatprep.subr.bf16.mxu0 0
      %472 = vmatpush1.bf16.xpose.msra.mxu0 0
      %473 = vmatprep.subr.bf16.mxu0 0
      %474 = vmatpush1.bf16.xpose.msra.mxu0 0
      %475 = vmatprep.subr.bf16.mxu0 0
      %476 = vmatpush1.bf16.xpose.msra.mxu0 0
      %477 = vmatprep.subr.bf16.mxu0 0
      %478 = vmatpush1.bf16.xpose.msra.mxu0 0
      %479 = vmatprep.subr.bf16.mxu0 0
      %480 = vmatpush1.bf16.xpose.msra.mxu0 0
      %481 = vmatprep.subr.bf16.mxu0 0
      %482 = vmatpush1.bf16.xpose.msra.mxu0 0
      %483 = vmatprep.subr.bf16.mxu0 0
      %484 = vmatpush1.bf16.xpose.msra.mxu0 0
      %485 = vmatprep.subr.bf16.mxu0 0
      %486 = vmatpush1.bf16.xpose.msra.mxu0 0
      %487 = vmatprep.subr.bf16.mxu0 0
      %488 = vmatpush1.bf16.xpose.msra.mxu0 0
      %489 = vmatprep.subr.bf16.mxu0 0
      %490 = vmatpush1.bf16.xpose.msra.mxu0 0
      %491 = vmatprep.subr.bf16.mxu0 0
      %492 = vmatpush1.bf16.xpose.msra.mxu0 0
      %493 = vmatprep.subr.bf16.mxu0 0
      %494 = vmatpush1.bf16.xpose.msra.mxu0 0
      %495 = vmatprep.subr.bf16.mxu0 0
      %496 = vmatpush1.bf16.xpose.msra.mxu0 0
      %497 = vmatprep.mubr.bf16.mxu0 0
      %498 = vmatmul.mubr.bf16.gmra.mrb[0].mxu0 %v460
      %v499 = vpop.f32.mrb[0].mxu0
      %v500 = vadd.f32 0.0, %v499
      %v501 = vpop.f32.mrb[0].mxu0
      %v502 = vpop.f32.mrb[0].mxu0
      %v503 = vpop.f32.mrb[0].mxu0
      %504 = vdwg.mxu0
      %v505 = vmul.f32 %v500, 0.17677669
      %v506 = vsel %vm344, %v505, -inf
      %507 = vmax.xlane.f32.xlu0 %v506
      %v508 = vpop.xlane.xlu0 %507
      %v509 = vsub.f32 %v505, %v508
      %v510 = vmul.f32 %v509, 1.442695
      %v511 = vpow.pop %v510
      %v512 = vsel %vm344, %v511, 0.0
      %513 = vadd.xlane.f32.xlu0 %v512
      %v514 = vpop.xlane.xlu0 %513
      %v515 = vrcp.pop %v514
      %v516 = vmul.f32 %v511, %v515
      %v517 = vpack.c.bf16 %v516, %v516
      %518 = vrot.lane.b32.xlu0 %v340, 56
      %v519 = vpop.permute.xlu0 %518
      %v521 = vsel %vm344, %v517, 0
      %v524 = vsel %vm409, %v519, 0
      %526 = vmatprep.subr.bf16.mxu0 0
      %527 = vmatpush1.bf16.msra.mxu0 %v524
      %528 = vmatprep.subr.bf16.mxu0 0
      %529 = vmatpush1.bf16.msra.mxu0 0
      %530 = vmatprep.subr.bf16.mxu0 0
      %531 = vmatpush1.bf16.msra.mxu0 0
      %532 = vmatprep.subr.bf16.mxu0 0
      %533 = vmatpush1.bf16.msra.mxu0 0
      %534 = vmatprep.subr.bf16.mxu0 0
      %535 = vmatpush1.bf16.msra.mxu0 0
      %536 = vmatprep.subr.bf16.mxu0 0
      %537 = vmatpush1.bf16.msra.mxu0 0
      %538 = vmatprep.subr.bf16.mxu0 0
      %539 = vmatpush1.bf16.msra.mxu0 0
      %540 = vmatprep.subr.bf16.mxu0 0
      %541 = vmatpush1.bf16.msra.mxu0 0
      %542 = vmatprep.subr.bf16.mxu0 0
      %543 = vmatpush1.bf16.msra.mxu0 0
      %544 = vmatprep.subr.bf16.mxu0 0
      %545 = vmatpush1.bf16.msra.mxu0 0
      %546 = vmatprep.subr.bf16.mxu0 0
      %547 = vmatpush1.bf16.msra.mxu0 0
      %548 = vmatprep.subr.bf16.mxu0 0
      %549 = vmatpush1.bf16.msra.mxu0 0
      %550 = vmatprep.subr.bf16.mxu0 0
      %551 = vmatpush1.bf16.msra.mxu0 0
      %552 = vmatprep.subr.bf16.mxu0 0
      %553 = vmatpush1.bf16.msra.mxu0 0
      %554 = vmatprep.subr.bf16.mxu0 0
      %555 = vmatpush1.bf16.msra.mxu0 0
      %556 = vmatprep.subr.bf16.mxu0 0
      %557 = vmatpush1.bf16.msra.mxu0 0
      %558 = vmatprep.mubr.bf16.mxu0 0
      %559 = vmatmul.mubr.bf16.gmra.mrb[0].mxu0 %v521
      %v560 = vpop.f32.mrb[0].mxu0
      %v561 = vadd.f32 0.0, %v560
      %v562 = vpop.f32.mrb[0].mxu0
      %v563 = vpop.f32.mrb[0].mxu0
      %v564 = vpop.f32.mrb[0].mxu0
      %565 = vdwg.mxu0
      %v566 = vpack.c.bf16 %v561, %v561
      %v567 = vld [vmem:[%s4 + $0x4] sm:$0xf]
      %v569 = vsel %vm344, %v566, 0
      %v572 = vsel %vm409, %v567, 0
      %574 = vmatprep.subr.bf16.mxu0 0
      %575 = vmatpush1.bf16.msra.mxu0 %v572
      %576 = vmatprep.subr.bf16.mxu0 0
      %577 = vmatpush1.bf16.msra.mxu0 0
      %578 = vmatprep.subr.bf16.mxu0 0
      %579 = vmatpush1.bf16.msra.mxu0 0
      %580 = vmatprep.subr.bf16.mxu0 0
      %581 = vmatpush1.bf16.msra.mxu0 0
      %582 = vmatprep.subr.bf16.mxu0 0
      %583 = vmatpush1.bf16.msra.mxu0 0
      %584 = vmatprep.subr.bf16.mxu0 0
      %585 = vmatpush1.bf16.msra.mxu0 0
      %586 = vmatprep.subr.bf16.mxu0 0
      %587 = vmatpush1.bf16.msra.mxu0 0
      %588 = vmatprep.subr.bf16.mxu0 0
      %589 = vmatpush1.bf16.msra.mxu0 0
      %590 = vmatprep.subr.bf16.mxu0 0
      %591 = vmatpush1.bf16.msra.mxu0 0
      %592 = vmatprep.subr.bf16.mxu0 0
      %593 = vmatpush1.bf16.msra.mxu0 0
      %594 = vmatprep.subr.bf16.mxu0 0
      %595 = vmatpush1.bf16.msra.mxu0 0
      %596 = vmatprep.subr.bf16.mxu0 0
      %597 = vmatpush1.bf16.msra.mxu0 0
      %598 = vmatprep.subr.bf16.mxu0 0
      %599 = vmatpush1.bf16.msra.mxu0 0
      %600 = vmatprep.subr.bf16.mxu0 0
      %601 = vmatpush1.bf16.msra.mxu0 0
      %602 = vmatprep.subr.bf16.mxu0 0
      %603 = vmatpush1.bf16.msra.mxu0 0
      %604 = vmatprep.subr.bf16.mxu0 0
      %605 = vmatpush1.bf16.msra.mxu0 0
      %606 = vmatprep.mubr.bf16.mxu0 0
      %607 = vmatmul.mubr.bf16.gmra.mrb[0].mxu0 %v569
      %v608 = vpop.f32.mrb[0].mxu0
      %v609 = vadd.f32 0.0, %v608
      %v610 = vpop.f32.mrb[0].mxu0
      %v611 = vpop.f32.mrb[0].mxu0
      %v612 = vpop.f32.mrb[0].mxu0
      %613 = vdwg.mxu0
      %v615 = vsel %vm344, %v453, 0
      %v618 = vsel %vm409, %v454, 0
      %620 = vmatprep.subr.bf16.mxu0 0
      %621 = vmatpush1.bf16.msra.mxu0 %v618
      %622 = vmatprep.subr.bf16.mxu0 0
      %623 = vmatpush1.bf16.msra.mxu0 0
      %624 = vmatprep.subr.bf16.mxu0 0
      %625 = vmatpush1.bf16.msra.mxu0 0
      %626 = vmatprep.subr.bf16.mxu0 0
      %627 = vmatpush1.bf16.msra.mxu0 0
      %628 = vmatprep.subr.bf16.mxu0 0
      %629 = vmatpush1.bf16.msra.mxu0 0
      %630 = vmatprep.subr.bf16.mxu0 0
      %631 = vmatpush1.bf16.msra.mxu0 0
      %632 = vmatprep.subr.bf16.mxu0 0
      %633 = vmatpush1.bf16.msra.mxu0 0
      %634 = vmatprep.subr.bf16.mxu0 0
      %635 = vmatpush1.bf16.msra.mxu0 0
      %636 = vmatprep.subr.bf16.mxu0 0
      %637 = vmatpush1.bf16.msra.mxu0 0
      %638 = vmatprep.subr.bf16.mxu0 0
      %639 = vmatpush1.bf16.msra.mxu0 0
      %640 = vmatprep.subr.bf16.mxu0 0
      %641 = vmatpush1.bf16.msra.mxu0 0
      %642 = vmatprep.subr.bf16.mxu0 0
      %643 = vmatpush1.bf16.msra.mxu0 0
      %644 = vmatprep.subr.bf16.mxu0 0
      %645 = vmatpush1.bf16.msra.mxu0 0
      %646 = vmatprep.subr.bf16.mxu0 0
      %647 = vmatpush1.bf16.msra.mxu0 0
      %648 = vmatprep.subr.bf16.mxu0 0
      %649 = vmatpush1.bf16.msra.mxu0 0
      %650 = vmatprep.subr.bf16.mxu0 0
      %651 = vmatpush1.bf16.msra.mxu0 0
      %652 = vmatprep.mubr.bf16.mxu0 0
      %653 = vmatmul.mubr.bf16.gmra.mrb[0].mxu0 %v615
      %v654 = vpop.f32.mrb[0].mxu0
      %v655 = vadd.f32 %v609, %v654
      %v656 = vpop.f32.mrb[0].mxu0
      %v657 = vpop.f32.mrb[0].mxu0
      %v658 = vpop.f32.mrb[0].mxu0
      %659 = vdwg.mxu0
      %660 = vrot.lane.b32.xlu0 %v340, 112
      %v661 = vpop.permute.xlu0 %660
      %662 = vrot.lane.b32.xlu0 %v340, 80
      %v663 = vpop.permute.xlu0 %662
      %v665 = vsel %vm344, %v661, 0
      %v668 = vsel %vm344, %v663, 0
      %670 = vmatprep.subr.bf16.mxu0 0
      %671 = vmatpush1.bf16.xpose.msra.mxu0 %v668
      %672 = vmatprep.subr.bf16.mxu0 0
      %673 = vmatpush1.bf16.xpose.msra.mxu0 0
      %674 = vmatprep.subr.bf16.mxu0 0
      %675 = vmatpush1.bf16.xpose.msra.mxu0 0
      %676 = vmatprep.subr.bf16.mxu0 0
      %677 = vmatpush1.bf16.xpose.msra.mxu0 0
      %678 = vmatprep.subr.bf16.mxu0 0
      %679 = vmatpush1.bf16.xpose.msra.mxu0 0
      %680 = vmatprep.subr.bf16.mxu0 0
      %681 = vmatpush1.bf16.xpose.msra.mxu0 0
      %682 = vmatprep.subr.bf16.mxu0 0
      %683 = vmatpush1.bf16.xpose.msra.mxu0 0
      %684 = vmatprep.subr.bf16.mxu0 0
      %685 = vmatpush1.bf16.xpose.msra.mxu0 0
      %686 = vmatprep.subr.bf16.mxu0 0
      %687 = vmatpush1.bf16.xpose.msra.mxu0 0
      %688 = vmatprep.subr.bf16.mxu0 0
      %689 = vmatpush1.bf16.xpose.msra.mxu0 0
      %690 = vmatprep.subr.bf16.mxu0 0
      %691 = vmatpush1.bf16.xpose.msra.mxu0 0
      %692 = vmatprep.subr.bf16.mxu0 0
      %693 = vmatpush1.bf16.xpose.msra.mxu0 0
      %694 = vmatprep.subr.bf16.mxu0 0
      %695 = vmatpush1.bf16.xpose.msra.mxu0 0
      %696 = vmatprep.subr.bf16.mxu0 0
      %697 = vmatpush1.bf16.xpose.msra.mxu0 0
      %698 = vmatprep.subr.bf16.mxu0 0
      %699 = vmatpush1.bf16.xpose.msra.mxu0 0
      %700 = vmatprep.subr.bf16.mxu0 0
      %701 = vmatpush1.bf16.xpose.msra.mxu0 0
      %702 = vmatprep.mubr.bf16.mxu0 0
      %703 = vmatmul.mubr.bf16.gmra.mrb[0].mxu0 %v665
      %v704 = vpop.f32.mrb[0].mxu0
      %v705 = vadd.f32 0.0, %v704
      %v706 = vpop.f32.mrb[0].mxu0
      %v707 = vpop.f32.mrb[0].mxu0
      %v708 = vpop.f32.mrb[0].mxu0
      %709 = vdwg.mxu0
      %v710 = vmul.f32 %v705, 0.17677669
      %v711 = vsel %vm344, %v710, -inf
      %712 = vmax.xlane.f32.xlu0 %v711
      %v713 = vpop.xlane.xlu0 %712
      %v714 = vsub.f32 %v710, %v713
      %v715 = vmul.f32 %v714, 1.442695
      %v716 = vpow.pop %v715
      %v717 = vsel %vm344, %v716, 0.0
      %718 = vadd.xlane.f32.xlu0 %v717
      %v719 = vpop.xlane.xlu0 %718
      %v720 = vrcp.pop %v719
      %v721 = vmul.f32 %v716, %v720
      %v722 = vpack.c.bf16 %v721, %v721
      %723 = vrot.lane.b32.xlu0 %v340, 48
      %v724 = vpop.permute.xlu0 %723
      %v726 = vsel %vm344, %v722, 0
      %v729 = vsel %vm409, %v724, 0
      %731 = vmatprep.subr.bf16.mxu0 0
      %732 = vmatpush1.bf16.msra.mxu0 %v729
      %733 = vmatprep.subr.bf16.mxu0 0
      %734 = vmatpush1.bf16.msra.mxu0 0
      %735 = vmatprep.subr.bf16.mxu0 0
      %736 = vmatpush1.bf16.msra.mxu0 0
      %737 = vmatprep.subr.bf16.mxu0 0
      %738 = vmatpush1.bf16.msra.mxu0 0
      %739 = vmatprep.subr.bf16.mxu0 0
      %740 = vmatpush1.bf16.msra.mxu0 0
      %741 = vmatprep.subr.bf16.mxu0 0
      %742 = vmatpush1.bf16.msra.mxu0 0
      %743 = vmatprep.subr.bf16.mxu0 0
      %744 = vmatpush1.bf16.msra.mxu0 0
      %745 = vmatprep.subr.bf16.mxu0 0
      %746 = vmatpush1.bf16.msra.mxu0 0
      %747 = vmatprep.subr.bf16.mxu0 0
      %748 = vmatpush1.bf16.msra.mxu0 0
      %749 = vmatprep.subr.bf16.mxu0 0
      %750 = vmatpush1.bf16.msra.mxu0 0
      %751 = vmatprep.subr.bf16.mxu0 0
      %752 = vmatpush1.bf16.msra.mxu0 0
      %753 = vmatprep.subr.bf16.mxu0 0
      %754 = vmatpush1.bf16.msra.mxu0 0
      %755 = vmatprep.subr.bf16.mxu0 0
      %756 = vmatpush1.bf16.msra.mxu0 0
      %757 = vmatprep.subr.bf16.mxu0 0
      %758 = vmatpush1.bf16.msra.mxu0 0
      %759 = vmatprep.subr.bf16.mxu0 0
      %760 = vmatpush1.bf16.msra.mxu0 0
      %761 = vmatprep.subr.bf16.mxu0 0
      %762 = vmatpush1.bf16.msra.mxu0 0
      %763 = vmatprep.mubr.bf16.mxu0 0
      %764 = vmatmul.mubr.bf16.gmra.mrb[0].mxu0 %v726
      %v765 = vpop.f32.mrb[0].mxu0
      %v766 = vadd.f32 0.0, %v765
      %v767 = vpop.f32.mrb[0].mxu0
      %v768 = vpop.f32.mrb[0].mxu0
      %v769 = vpop.f32.mrb[0].mxu0
      %770 = vdwg.mxu0
      %v771 = vpack.c.bf16 %v766, %v766
      %v772 = vld [vmem:[%s4 + $0x8] sm:$0xf]
      %v774 = vsel %vm344, %v771, 0
      %v777 = vsel %vm409, %v772, 0
      %779 = vmatprep.subr.bf16.mxu0 0
      %780 = vmatpush1.bf16.msra.mxu0 %v777
      %781 = vmatprep.subr.bf16.mxu0 0
      %782 = vmatpush1.bf16.msra.mxu0 0
      %783 = vmatprep.subr.bf16.mxu0 0
      %784 = vmatpush1.bf16.msra.mxu0 0
      %785 = vmatprep.subr.bf16.mxu0 0
      %786 = vmatpush1.bf16.msra.mxu0 0
      %787 = vmatprep.subr.bf16.mxu0 0
      %788 = vmatpush1.bf16.msra.mxu0 0
      %789 = vmatprep.subr.bf16.mxu0 0
      %790 = vmatpush1.bf16.msra.mxu0 0
      %791 = vmatprep.subr.bf16.mxu0 0
      %792 = vmatpush1.bf16.msra.mxu0 0
      %793 = vmatprep.subr.bf16.mxu0 0
      %794 = vmatpush1.bf16.msra.mxu0 0
      %795 = vmatprep.subr.bf16.mxu0 0
      %796 = vmatpush1.bf16.msra.mxu0 0
      %797 = vmatprep.subr.bf16.mxu0 0
      %798 = vmatpush1.bf16.msra.mxu0 0
      %799 = vmatprep.subr.bf16.mxu0 0
      %800 = vmatpush1.bf16.msra.mxu0 0
      %801 = vmatprep.subr.bf16.mxu0 0
      %802 = vmatpush1.bf16.msra.mxu0 0
      %803 = vmatprep.subr.bf16.mxu0 0
      %804 = vmatpush1.bf16.msra.mxu0 0
      %805 = vmatprep.subr.bf16.mxu0 0
      %806 = vmatpush1.bf16.msra.mxu0 0
      %807 = vmatprep.subr.bf16.mxu0 0
      %808 = vmatpush1.bf16.msra.mxu0 0
      %809 = vmatprep.subr.bf16.mxu0 0
      %810 = vmatpush1.bf16.msra.mxu0 0
      %811 = vmatprep.mubr.bf16.mxu0 0
      %812 = vmatmul.mubr.bf16.gmra.mrb[0].mxu0 %v774
      %v813 = vpop.f32.mrb[0].mxu0
      %v814 = vadd.f32 0.0, %v813
      %v815 = vpop.f32.mrb[0].mxu0
      %v816 = vpop.f32.mrb[0].mxu0
      %v817 = vpop.f32.mrb[0].mxu0
      %818 = vdwg.mxu0
      %v819 = vadd.f32 %v655, %v814
      %820 = vrot.lane.b32.xlu0 %v340, 104
      %v821 = vpop.permute.xlu0 %820
      %822 = vrot.lane.b32.xlu0 %v340, 72
      %v823 = vpop.permute.xlu0 %822
      %v825 = vsel %vm344, %v821, 0
      %v828 = vsel %vm344, %v823, 0
      %830 = vmatprep.subr.bf16.mxu0 0
      %831 = vmatpush1.bf16.xpose.msra.mxu0 %v828
      %832 = vmatprep.subr.bf16.mxu0 0
      %833 = vmatpush1.bf16.xpose.msra.mxu0 0
      %834 = vmatprep.subr.bf16.mxu0 0
      %835 = vmatpush1.bf16.xpose.msra.mxu0 0
      %836 = vmatprep.subr.bf16.mxu0 0
      %837 = vmatpush1.bf16.xpose.msra.mxu0 0
      %838 = vmatprep.subr.bf16.mxu0 0
      %839 = vmatpush1.bf16.xpose.msra.mxu0 0
      %840 = vmatprep.subr.bf16.mxu0 0
      %841 = vmatpush1.bf16.xpose.msra.mxu0 0
      %842 = vmatprep.subr.bf16.mxu0 0
      %843 = vmatpush1.bf16.xpose.msra.mxu0 0
      %844 = vmatprep.subr.bf16.mxu0 0
      %845 = vmatpush1.bf16.xpose.msra.mxu0 0
      %846 = vmatprep.subr.bf16.mxu0 0
      %847 = vmatpush1.bf16.xpose.msra.mxu0 0
      %848 = vmatprep.subr.bf16.mxu0 0
      %849 = vmatpush1.bf16.xpose.msra.mxu0 0
      %850 = vmatprep.subr.bf16.mxu0 0
      %851 = vmatpush1.bf16.xpose.msra.mxu0 0
      %852 = vmatprep.subr.bf16.mxu0 0
      %853 = vmatpush1.bf16.xpose.msra.mxu0 0
      %854 = vmatprep.subr.bf16.mxu0 0
      %855 = vmatpush1.bf16.xpose.msra.mxu0 0
      %856 = vmatprep.subr.bf16.mxu0 0
      %857 = vmatpush1.bf16.xpose.msra.mxu0 0
      %858 = vmatprep.subr.bf16.mxu0 0
      %859 = vmatpush1.bf16.xpose.msra.mxu0 0
      %860 = vmatprep.subr.bf16.mxu0 0
      %861 = vmatpush1.bf16.xpose.msra.mxu0 0
      %862 = vmatprep.mubr.bf16.mxu0 0
      %863 = vmatmul.mubr.bf16.gmra.mrb[0].mxu0 %v825
      %v864 = vpop.f32.mrb[0].mxu0
      %v865 = vadd.f32 0.0, %v864
      %v866 = vpop.f32.mrb[0].mxu0
      %v867 = vpop.f32.mrb[0].mxu0
      %v868 = vpop.f32.mrb[0].mxu0
      %869 = vdwg.mxu0
      %v870 = vmul.f32 %v865, 0.17677669
      %v871 = vsel %vm344, %v870, -inf
      %872 = vmax.xlane.f32.xlu0 %v871
      %v873 = vpop.xlane.xlu0 %872
      %v874 = vsub.f32 %v870, %v873
      %v875 = vmul.f32 %v874, 1.442695
      %v876 = vpow.pop %v875
      %v877 = vsel %vm344, %v876, 0.0
      %878 = vadd.xlane.f32.xlu0 %v877
      %v879 = vpop.xlane.xlu0 %878
      %v880 = vrcp.pop %v879
      %v881 = vmul.f32 %v876, %v880
      %v882 = vpack.c.bf16 %v881, %v881
      %883 = vrot.lane.b32.xlu0 %v340, 40
      %v884 = vpop.permute.xlu0 %883
      %v886 = vsel %vm344, %v882, 0
      %v889 = vsel %vm409, %v884, 0
      %891 = vmatprep.subr.bf16.mxu0 0
      %892 = vmatpush1.bf16.msra.mxu0 %v889
      %893 = vmatprep.subr.bf16.mxu0 0
      %894 = vmatpush1.bf16.msra.mxu0 0
      %895 = vmatprep.subr.bf16.mxu0 0
      %896 = vmatpush1.bf16.msra.mxu0 0
      %897 = vmatprep.subr.bf16.mxu0 0
      %898 = vmatpush1.bf16.msra.mxu0 0
      %899 = vmatprep.subr.bf16.mxu0 0
      %900 = vmatpush1.bf16.msra.mxu0 0
      %901 = vmatprep.subr.bf16.mxu0 0
      %902 = vmatpush1.bf16.msra.mxu0 0
      %903 = vmatprep.subr.bf16.mxu0 0
      %904 = vmatpush1.bf16.msra.mxu0 0
      %905 = vmatprep.subr.bf16.mxu0 0
      %906 = vmatpush1.bf16.msra.mxu0 0
      %907 = vmatprep.subr.bf16.mxu0 0
      %908 = vmatpush1.bf16.msra.mxu0 0
      %909 = vmatprep.subr.bf16.mxu0 0
      %910 = vmatpush1.bf16.msra.mxu0 0
      %911 = vmatprep.subr.bf16.mxu0 0
      %912 = vmatpush1.bf16.msra.mxu0 0
      %913 = vmatprep.subr.bf16.mxu0 0
      %914 = vmatpush1.bf16.msra.mxu0 0
      %915 = vmatprep.subr.bf16.mxu0 0
      %916 = vmatpush1.bf16.msra.mxu0 0
      %917 = vmatprep.subr.bf16.mxu0 0
      %918 = vmatpush1.bf16.msra.mxu0 0
      %919 = vmatprep.subr.bf16.mxu0 0
      %920 = vmatpush1.bf16.msra.mxu0 0
      %921 = vmatprep.subr.bf16.mxu0 0
      %922 = vmatpush1.bf16.msra.mxu0 0
      %923 = vmatprep.mubr.bf16.mxu0 0
      %924 = vmatmul.mubr.bf16.gmra.mrb[0].mxu0 %v886
      %v925 = vpop.f32.mrb[0].mxu0
      %v926 = vadd.f32 0.0, %v925
      %v927 = vpop.f32.mrb[0].mxu0
      %v928 = vpop.f32.mrb[0].mxu0
      %v929 = vpop.f32.mrb[0].mxu0
      %930 = vdwg.mxu0
      %v931 = vpack.c.bf16 %v926, %v926
      %v932 = vld [vmem:[%s4 + $0xc] sm:$0xf]
      %v934 = vsel %vm344, %v931, 0
      %v937 = vsel %vm409, %v932, 0
      %939 = vmatprep.subr.bf16.mxu0 0
      %940 = vmatpush1.bf16.msra.mxu0 %v937
      %941 = vmatprep.subr.bf16.mxu0 0
      %942 = vmatpush1.bf16.msra.mxu0 0
      %943 = vmatprep.subr.bf16.mxu0 0
      %944 = vmatpush1.bf16.msra.mxu0 0
      %945 = vmatprep.subr.bf16.mxu0 0
      %946 = vmatpush1.bf16.msra.mxu0 0
      %947 = vmatprep.subr.bf16.mxu0 0
      %948 = vmatpush1.bf16.msra.mxu0 0
      %949 = vmatprep.subr.bf16.mxu0 0
      %950 = vmatpush1.bf16.msra.mxu0 0
      %951 = vmatprep.subr.bf16.mxu0 0
      %952 = vmatpush1.bf16.msra.mxu0 0
      %953 = vmatprep.subr.bf16.mxu0 0
      %954 = vmatpush1.bf16.msra.mxu0 0
      %955 = vmatprep.subr.bf16.mxu0 0
      %956 = vmatpush1.bf16.msra.mxu0 0
      %957 = vmatprep.subr.bf16.mxu0 0
      %958 = vmatpush1.bf16.msra.mxu0 0
      %959 = vmatprep.subr.bf16.mxu0 0
      %960 = vmatpush1.bf16.msra.mxu0 0
      %961 = vmatprep.subr.bf16.mxu0 0
      %962 = vmatpush1.bf16.msra.mxu0 0
      %963 = vmatprep.subr.bf16.mxu0 0
      %964 = vmatpush1.bf16.msra.mxu0 0
      %965 = vmatprep.subr.bf16.mxu0 0
      %966 = vmatpush1.bf16.msra.mxu0 0
      %967 = vmatprep.subr.bf16.mxu0 0
      %968 = vmatpush1.bf16.msra.mxu0 0
      %969 = vmatprep.subr.bf16.mxu0 0
      %970 = vmatpush1.bf16.msra.mxu0 0
      %971 = vmatprep.mubr.bf16.mxu0 0
      %972 = vmatmul.mubr.bf16.gmra.mrb[0].mxu0 %v934
      %v973 = vpop.f32.mrb[0].mxu0
      %v974 = vadd.f32 0.0, %v973
      %v975 = vpop.f32.mrb[0].mxu0
      %v976 = vpop.f32.mrb[0].mxu0
      %v977 = vpop.f32.mrb[0].mxu0
      %978 = vdwg.mxu0
      %v979 = vadd.f32 %v819, %v974
      %v980 = vld [vmem:[%s5] sm:$0x1]
      %v982 = vlaneseq
      %v983 = vshrl.u32 %v982, 7
      %v984 = vsub.s32 0, %v983
      %v985 = vrot.slane %v980, %v984
      %v987 = vadd.f32 %v979, %v985
      %v988 = vadd.f32 %v248, %v987
      %989 = vst.msk [vmem:[%s246] sm:$0xff] %vm251, %v988
      %p990 = scmp.lt.s32.totalorder %s17, 1
      %s991 = scalar_select %p990, %s17, 1
      %s992 = smul.addr %s991, 8
      %s993 = scalar_lea.vmem %s6, %s992
      // Predicated region
      $region45: #{bert_forward.5} parent=43 // pred_check
        %p994 = pneg %p166
      $region46: #{bert_forward.5} parent=43 // pred_check_branch
        %996 = sbr.rel (%p994) target = $region48
      $region47: #{bert_forward.5} parent=43 // pred_region
        _
      $region48: #{bert_forward.5} parent=43 // pred_fallthru
        _
    $region44: #{bert_forward.5} parent=5 // pred_fallthru
      _
    %p997 = scmp.le.s32.totalorder 2, %s12
    // Predicated region
    $region49: #{bert_forward.5} parent=5 // pred_check
      %p998 = pneg %p997
    $region50: #{bert_forward.5} parent=5 // pred_check_branch
      %1000 = sbr.rel (%p998) target = $region52
    $region51: #{bert_forward.5} parent=5 // pred_region
      %s1001 = ssub.s32 %s12, 2
      // Predicated region
      $region53: #{bert_forward.5} parent=51 // pred_check
        %p1002 = pneg %p172
      $region54: #{bert_forward.5} parent=51 // pred_check_branch
        %1004 = sbr.rel (%p1002) target = $region56
      $region55: #{bert_forward.5} parent=51 // pred_region
        %p1005 = scmp.lt.s32.totalorder %s18, 1
        %s1006 = scalar_select %p1005, %s18, 1
        %s1007 = smul.addr %s1006, 8
        %s1008 = scalar_lea.vmem %s6, %s1007
      $region56: #{bert_forward.5} parent=51 // pred_fallthru
        _
    $region52: #{bert_forward.5} parent=5 // pred_fallthru
      _
  $region6: #{bert_forward.5} parent=0 // loop_footer
    %s16 = sadd.s32 1, %s12
  $region7: #{bert_forward.5} parent=0 // loop_footer_branch
    %11 = sbr.rel target = $region3
  $region8: #{bert_forward.5} parent=0 // loop_exit
    _

</llo_original>
